<compile_context>
chip_gen: v7x
topology: tpu7x:2x2x1
jax: 0.10.0
libtpu: 0.0.40
codegen_flags: <defaults>
</compile_context>

<pallas_src>
import functools

import jax
import jax.numpy as jnp
import numpy as np
from jax import lax
from jax.experimental import pallas as pl
from jax.experimental.pallas import tpu as pltpu


def _round_up(n, m):
    return ((n + m - 1) // m) * m


# Tile sizes: B_t(<=8) * O_TILE * M_TILE * 2 planes * 4 B <= 64 KiB, i.e. the
# fori_loop accumulator occupies <= 16 of the 64 vregs and does not spill.
_O_TILE = 8
_M_TILE = 128
_B_TILE_MAX = 8


# ---------------------------------------------------------------------------
# Pallas kernel:   out[b, o, m] = sum_i x[b, i, m] * w[i, o, m]    (complex)
# ---------------------------------------------------------------------------
def _spectral_modes_kernel(x_ref, w_ref, o_ref, *, num_in, unroll):
    """x_ref: (2, I_pad, B_t, M_t)   stacked [xr, xi]
       w_ref: (2, I_pad, O_t, M_t)   stacked [wr, wi]   (resident across b steps)
       o_ref: (2, B_t, O_t, M_t)     stacked [out_r, out_i]
    """
    b_t, o_t, m_t = o_ref.shape[1], o_ref.shape[2], o_ref.shape[3]
    zeros = jnp.zeros((b_t, o_t, m_t), jnp.float32)

    def body(i, carry):
        acc_r, acc_i = carry
        xr = x_ref[0, i][:, None, :]          # (B_t, 1, M_t)
        xi = x_ref[1, i][:, None, :]
        wr = w_ref[0, i][None, :, :]          # (1, O_t, M_t)
        wi = w_ref[1, i][None, :, :]
        acc_r = acc_r + xr * wr - xi * wi     # register accumulation, no RMW
        acc_i = acc_i + xr * wi + xi * wr
        return acc_r, acc_i

    acc_r, acc_i = lax.fori_loop(0, num_in, body, (zeros, zeros), unroll=unroll)
    # Single lane-dense store of the whole output block.
    o_ref[0] = acc_r
    o_ref[1] = acc_i


def pack_spectral_weights(weights1, weights2):
    """Hoisted, cache-once weight preprocessing for SpectralConv2d_fast.

    weights1/weights2: complex64 (I, O, modes1, modes2)  ->  float32
    (2, I_pad, O_pad, M_pad): both retained-mode corners folded into one
    lane-dense mode axis M = 2*modes1*modes2, [real, imag] stacked, padded to
    the kernel's tile multiples."""
    I, O, m1, m2 = weights1.shape
    M = 2 * m1 * m2
    w = jnp.concatenate([weights1.reshape(I, O, m1 * m2),
                         weights2.reshape(I, O, m1 * m2)], axis=-1)     # (I,O,M)
    w_ri = jnp.stack([jnp.real(w), jnp.imag(w)], axis=0).astype(jnp.float32)
    I_pad = _round_up(I, 8)
    O_pad = _round_up(O, _O_TILE)
    M_pad = _round_up(M, _M_TILE)
    return jnp.pad(w_ri, ((0, 0), (0, I_pad - I), (0, O_pad - O), (0, M_pad - M)))


def spectral_modes_matmul_pallas(x_modes, w_packed, out_channels):
    """x_modes: complex64 (B, I, M); w_packed: float32 (2, I_pad, O_pad, M_pad).
    Returns complex64 (B, O, M) with out[b,o,m] = sum_i x[b,i,m] * w[i,o,m]."""
    B, I, M = x_modes.shape
    O = out_channels
    _, I_pad, O_pad, M_pad = w_packed.shape

    B_t = B if B <= _B_TILE_MAX else _B_TILE_MAX
    B_pad = _round_up(B, B_t)
    O_t = _O_TILE
    M_t = _M_TILE

    # x laid out (2, I, B, M): per-input-channel slice is a cheap major-axis
    # index in the kernel; B is on a block axis with no (8,128) requirement
    # (B_t == full extent when B <= 8, multiple of 8 otherwise); M is lane.
    xr = jnp.real(x_modes).astype(jnp.float32)
    xi = jnp.imag(x_modes).astype(jnp.float32)
    x_ri = jnp.stack([xr, xi], axis=0).transpose(0, 2, 1, 3)            # (2,I,B,M)
    x_ri = jnp.pad(x_ri, ((0, 0), (0, I_pad - I), (0, B_pad - B), (0, M_pad - M)))

    num_o = O_pad // O_t
    num_m = M_pad // M_t
    num_b = B_pad // B_t

    # VMEM budget: double-buffered per-block bytes + headroom, clamped so it is
    # valid on v5e/v6e (128 MiB physical) and v7x (64 MiB physical).
    x_block = 4 * 2 * I_pad * B_t * M_t
    w_block = 4 * 2 * I_pad * O_t * M_t
    o_block = 4 * 2 * B_t * O_t * M_t
    vmem_need = 2 * (x_block + w_block + o_block)
    vmem_limit = int(min(64 * 1024 * 1024,
                         max(32 * 1024 * 1024, int(1.25 * vmem_need))))

    kernel = functools.partial(
        _spectral_modes_kernel,
        num_in=I,                               # skip the zero-padded channels
        unroll=True if I <= 16 else 8,
    )

    out = pl.pallas_call(
        kernel,
        out_shape=jax.ShapeDtypeStruct((2, B_pad, O_pad, M_pad), jnp.float32),
        # Batch innermost: the (o, m) weight tile stays VMEM-resident across
        # all batch steps; every grid axis is independent -> all "parallel".
        grid=(num_o, num_m, num_b),
        in_specs=[
            pl.BlockSpec((2, I_pad, B_t, M_t), lambda o, m, b: (0, 0, b, m)),
            pl.BlockSpec((2, I_pad, O_t, M_t), lambda o, m, b: (0, 0, o, m)),
        ],
        out_specs=pl.BlockSpec((2, B_t, O_t, M_t), lambda o, m, b: (0, b, o, m)),
        compiler_params=pltpu.CompilerParams(
            dimension_semantics=("parallel", "parallel", "parallel"),
            vmem_limit_bytes=vmem_limit,
        ),
    )(x_ri, w_packed)

    out_c = out[0, :B, :O, :M] + 1j * out[1, :B, :O, :M]
    return out_c.astype(jnp.complex64)


# ---------------------------------------------------------------------------
# SpectralConv2d_fast forward (FFT glue in JAX, mode contraction in Pallas)
# ---------------------------------------------------------------------------
def spectral_conv2d_fast_forward(x, w_packed, out_channels, modes1, modes2):
    """x: (B, C_in, H, W) float32; w_packed: packed weights from
    pack_spectral_weights (hoisted out of the per-call hot path)."""
    B, Cin, H, W = x.shape
    M = modes1 * modes2

    # TODO(synk): rfft2 / irfft2 have no Pallas TPU primitive; they stay in jnp.fft.
    x_ft = jnp.fft.rfft2(x)                                        # (B, Cin, H, W//2+1)

    top = x_ft[:, :, :modes1, :modes2].reshape(B, Cin, M)
    bot = x_ft[:, :, H - modes1:, :modes2].reshape(B, Cin, M)
    # Fold the two retained-mode corners into one flattened (lane) mode axis.
    x_modes = jnp.concatenate([top, bot], axis=-1)                 # (B, Cin, 2M)

    out_modes = spectral_modes_matmul_pallas(x_modes, w_packed, out_channels)

    Wf = W // 2 + 1
    out_ft = jnp.zeros((B, out_channels, H, Wf), dtype=jnp.complex64)
    out_ft = out_ft.at[:, :, :modes1, :modes2].set(
        out_modes[:, :, :M].reshape(B, out_channels, modes1, modes2))
    out_ft = out_ft.at[:, :, H - modes1:, :modes2].set(
        out_modes[:, :, M:].reshape(B, out_channels, modes1, modes2))
    return jnp.fft.irfft2(out_ft, s=(H, W))


def spectral_conv2d_ref(x, weights1, weights2, modes1, modes2):
    """Pure-JAX reference of SpectralConv2d_fast.forward (for cross-checking)."""
    B, Cin, H, W = x.shape
    Cout = weights1.shape[1]
    x_ft = jnp.fft.rfft2(x)
    out_ft = jnp.zeros((B, Cout, H, W // 2 + 1), dtype=jnp.complex64)
    out_ft = out_ft.at[:, :, :modes1, :modes2].set(
        jnp.einsum('bixy,ioxy->boxy', x_ft[:, :, :modes1, :modes2], weights1))
    out_ft = out_ft.at[:, :, H - modes1:, :modes2].set(
        jnp.einsum('bixy,ioxy->boxy', x_ft[:, :, H - modes1:, :modes2], weights2))
    return jnp.fft.irfft2(out_ft, s=(H, W))


# ---------------------------------------------------------------------------
# Full FNO2d forward (glue ops in plain JAX, spectral layers use the kernel)
# ---------------------------------------------------------------------------
def fno2d_forward(x, params, modes1, modes2, *, use_pallas=True):
    """x: (B, H, W, 1) float32 -> (B, num_channels) float32."""
    B, H, W, _ = x.shape
    width = params['fc0_w'].shape[1]
    gridx = jnp.broadcast_to(
        jnp.linspace(0.0, 1.0, H, dtype=jnp.float32)[None, :, None, None], (B, H, W, 1))
    gridy = jnp.broadcast_to(
        jnp.linspace(0.0, 1.0, W, dtype=jnp.float32)[None, None, :, None], (B, H, W, 1))
    h = jnp.concatenate([x, gridx, gridy], axis=-1)                # (B, H, W, 3)
    h = h @ params['fc0_w'] + params['fc0_b']                      # (B, H, W, width)
    h = jnp.transpose(h, (0, 3, 1, 2))                             # (B, width, H, W)

    for l in range(4):
        if use_pallas:
            h1 = spectral_conv2d_fast_forward(
                h, params[f'conv{l}_wpacked'], width, modes1, modes2)
        else:
            h1 = spectral_conv2d_ref(
                h, params[f'conv{l}_w1'], params[f'conv{l}_w2'], modes1, modes2)
        h2 = (jnp.einsum('oi,bihw->bohw', params[f'w{l}_w'], h)
              + params[f'w{l}_b'][None, :, None, None])            # 1x1 conv
        h = h1 + h2
        if l < 3:
            h = jax.nn.gelu(h, approximate=False)

    h = h.mean(axis=(-2, -1))                                      # (B, width)
    return h @ params['fc1_w'] + params['fc1_b']                   # (B, num_channels)


def init_fno2d_params(key, modes1, modes2, width, num_channels):
    keys = list(jax.random.split(key, 32))
    it = iter(keys)
    p = {}
    p['fc0_w'] = jax.random.normal(next(it), (3, width), jnp.float32) / jnp.sqrt(3.0)
    p['fc0_b'] = 0.1 * jax.random.normal(next(it), (width,), jnp.float32)
    scale = 1.0 / (width * width)
    wshape = (width, width, modes1, modes2)
    for l in range(4):
        p[f'conv{l}_w1'] = (scale * (jax.random.uniform(next(it), wshape)
                                     + 1j * jax.random.uniform(next(it), wshape))
                            ).astype(jnp.complex64)
        p[f'conv{l}_w2'] = (scale * (jax.random.uniform(next(it), wshape)
                                     + 1j * jax.random.uniform(next(it), wshape))
                            ).astype(jnp.complex64)
        p[f'w{l}_w'] = jax.random.normal(next(it), (width, width), jnp.float32) / width
        p[f'w{l}_b'] = 0.1 * jax.random.normal(next(it), (width,), jnp.float32)
    p['fc1_w'] = jax.random.normal(next(it), (width, num_channels), jnp.float32) / jnp.sqrt(width)
    p['fc1_b'] = jnp.zeros((num_channels,), jnp.float32)
    return p


def prepare_fno2d_params(params):
    """Hoisted, one-time weight packing for the Pallas spectral layers."""
    p = dict(params)
    for l in range(4):
        p[f'conv{l}_wpacked'] = pack_spectral_weights(
            params[f'conv{l}_w1'], params[f'conv{l}_w2'])
    return p


if __name__ == "__main__":
    batch, H, W = 2, 16, 16
    modes1 = modes2 = 4
    width = 8
    num_channels = 1

    key = jax.random.PRNGKey(0)
    kp, kx, kx2 = jax.random.split(key, 3)
    params = init_fno2d_params(kp, modes1, modes2, width, num_channels)
    params = prepare_fno2d_params(params)      # weight preprocessing hoisted/cached
    x = jax.random.normal(kx, (batch, H, W, 1), dtype=jnp.float32)

    fwd_pallas = jax.jit(functools.partial(
        fno2d_forward, modes1=modes1, modes2=modes2, use_pallas=True))
    fwd_ref = jax.jit(functools.partial(
        fno2d_forward, modes1=modes1, modes2=modes2, use_pallas=False))

    out = jax.block_until_ready(fwd_pallas(x, params))
    assert out.shape == (batch, num_channels)
    assert out.dtype == jnp.float32

    # Kernel-level cross-check: one spectral layer, Pallas vs plain-JAX einsum.
    x_nchw = jax.random.normal(kx2, (batch, width, H, W), dtype=jnp.float32)
    got_layer = spectral_conv2d_fast_forward(
        x_nchw, params['conv0_wpacked'], width, modes1, modes2)
    ref_layer = spectral_conv2d_ref(
        x_nchw, params['conv0_w1'], params['conv0_w2'], modes1, modes2)
    np.testing.assert_allclose(np.asarray(got_layer), np.asarray(ref_layer),
                               rtol=1e-4, atol=1e-4)

    # Full-forward cross-check against the pure-JAX reference.
    ref_out = jax.block_until_ready(fwd_ref(x, params))
    np.testing.assert_allclose(np.asarray(out), np.asarray(ref_out),
                               rtol=1e-4, atol=1e-4)

    print("KERNEL_OK")
</pallas_src>

<mosaic_0001>
module attributes {stable_mosaic.version = 11 : i64} {
  func.func @_spectral_modes_kernel(%arg0: i32, %arg1: i32, %arg2: i32, %arg3: memref<2x8x2x128xf32, #tpu.memory_space<vmem>>, %arg4: memref<2x8x8x128xf32, #tpu.memory_space<vmem>>, %arg5: memref<2x2x8x128xf32, #tpu.memory_space<vmem>>) attributes {dimension_semantics = [#tpu.dimension_semantics<parallel>, #tpu.dimension_semantics<parallel>, #tpu.dimension_semantics<parallel>], iteration_bounds = array<i64: 1, 1, 1>, scalar_prefetch = 0 : i64, scratch_operands = 0 : i64, tpu.core_type = #tpu.core_type<tc>, window_params = [{transform_indices = @transform_0, window_bounds = array<i64: 2, 8, 2, 128>}, {transform_indices = @transform_1, window_bounds = array<i64: 2, 8, 8, 128>}, {transform_indices = @transform_2, window_bounds = array<i64: 2, 2, 8, 128>}]} {
    %cst = arith.constant 0.000000e+00 : f32
    %0 = vector.broadcast %cst : f32 to vector<2x8x128xf32>
    %c0_i32 = arith.constant 0 : i32
    %c0 = arith.constant 0 : index
    %1 = arith.index_cast %c0_i32 : i32 to index
    %c0_0 = arith.constant 0 : index
    %c0_1 = arith.constant 0 : index
    %2 = vector.load %arg3[%c0, %1, %c0_0, %c0_1] : memref<2x8x2x128xf32, #tpu.memory_space<vmem>>, vector<1x1x2x128xf32>
    %3 = vector.shape_cast %2 : vector<1x1x2x128xf32> to vector<2x128xf32>
    %4 = vector.shape_cast %3 : vector<2x128xf32> to vector<2x1x128xf32>
    %c1 = arith.constant 1 : index
    %5 = arith.index_cast %c0_i32 : i32 to index
    %c0_2 = arith.constant 0 : index
    %c0_3 = arith.constant 0 : index
    %6 = vector.load %arg3[%c1, %5, %c0_2, %c0_3] : memref<2x8x2x128xf32, #tpu.memory_space<vmem>>, vector<1x1x2x128xf32>
    %7 = vector.shape_cast %6 : vector<1x1x2x128xf32> to vector<2x128xf32>
    %8 = vector.shape_cast %7 : vector<2x128xf32> to vector<2x1x128xf32>
    %c0_4 = arith.constant 0 : index
    %9 = arith.index_cast %c0_i32 : i32 to index
    %c0_5 = arith.constant 0 : index
    %c0_6 = arith.constant 0 : index
    %10 = vector.load %arg4[%c0_4, %9, %c0_5, %c0_6] : memref<2x8x8x128xf32, #tpu.memory_space<vmem>>, vector<1x1x8x128xf32>
    %11 = vector.shape_cast %10 : vector<1x1x8x128xf32> to vector<8x128xf32>
    %12 = vector.shape_cast %11 : vector<8x128xf32> to vector<1x8x128xf32>
    %c1_7 = arith.constant 1 : index
    %13 = arith.index_cast %c0_i32 : i32 to index
    %c0_8 = arith.constant 0 : index
    %c0_9 = arith.constant 0 : index
    %14 = vector.load %arg4[%c1_7, %13, %c0_8, %c0_9] : memref<2x8x8x128xf32, #tpu.memory_space<vmem>>, vector<1x1x8x128xf32>
    %15 = vector.shape_cast %14 : vector<1x1x8x128xf32> to vector<8x128xf32>
    %16 = vector.shape_cast %15 : vector<8x128xf32> to vector<1x8x128xf32>
    %17 = vector.broadcast %4 : vector<2x1x128xf32> to vector<2x8x128xf32>
    %18 = vector.broadcast %12 : vector<1x8x128xf32> to vector<2x8x128xf32>
    %19 = arith.mulf %17, %18 : vector<2x8x128xf32>
    %20 = arith.addf %0, %19 : vector<2x8x128xf32>
    %21 = vector.broadcast %8 : vector<2x1x128xf32> to vector<2x8x128xf32>
    %22 = vector.broadcast %16 : vector<1x8x128xf32> to vector<2x8x128xf32>
    %23 = arith.mulf %21, %22 : vector<2x8x128xf32>
    %24 = arith.subf %20, %23 : vector<2x8x128xf32>
    %25 = vector.broadcast %4 : vector<2x1x128xf32> to vector<2x8x128xf32>
    %26 = vector.broadcast %16 : vector<1x8x128xf32> to vector<2x8x128xf32>
    %27 = arith.mulf %25, %26 : vector<2x8x128xf32>
    %28 = arith.addf %0, %27 : vector<2x8x128xf32>
    %29 = vector.broadcast %8 : vector<2x1x128xf32> to vector<2x8x128xf32>
    %30 = vector.broadcast %12 : vector<1x8x128xf32> to vector<2x8x128xf32>
    %31 = arith.mulf %29, %30 : vector<2x8x128xf32>
    %32 = arith.addf %28, %31 : vector<2x8x128xf32>
    %c1_i32 = arith.constant 1 : i32
    %c0_10 = arith.constant 0 : index
    %33 = arith.index_cast %c1_i32 : i32 to index
    %c0_11 = arith.constant 0 : index
    %c0_12 = arith.constant 0 : index
    %34 = vector.load %arg3[%c0_10, %33, %c0_11, %c0_12] : memref<2x8x2x128xf32, #tpu.memory_space<vmem>>, vector<1x1x2x128xf32>
    %35 = vector.shape_cast %34 : vector<1x1x2x128xf32> to vector<2x128xf32>
    %36 = vector.shape_cast %35 : vector<2x128xf32> to vector<2x1x128xf32>
    %c1_13 = arith.constant 1 : index
    %37 = arith.index_cast %c1_i32 : i32 to index
    %c0_14 = arith.constant 0 : index
    %c0_15 = arith.constant 0 : index
    %38 = vector.load %arg3[%c1_13, %37, %c0_14, %c0_15] : memref<2x8x2x128xf32, #tpu.memory_space<vmem>>, vector<1x1x2x128xf32>
    %39 = vector.shape_cast %38 : vector<1x1x2x128xf32> to vector<2x128xf32>
    %40 = vector.shape_cast %39 : vector<2x128xf32> to vector<2x1x128xf32>
    %c0_16 = arith.constant 0 : index
    %41 = arith.index_cast %c1_i32 : i32 to index
    %c0_17 = arith.constant 0 : index
    %c0_18 = arith.constant 0 : index
    %42 = vector.load %arg4[%c0_16, %41, %c0_17, %c0_18] : memref<2x8x8x128xf32, #tpu.memory_space<vmem>>, vector<1x1x8x128xf32>
    %43 = vector.shape_cast %42 : vector<1x1x8x128xf32> to vector<8x128xf32>
    %44 = vector.shape_cast %43 : vector<8x128xf32> to vector<1x8x128xf32>
    %c1_19 = arith.constant 1 : index
    %45 = arith.index_cast %c1_i32 : i32 to index
    %c0_20 = arith.constant 0 : index
    %c0_21 = arith.constant 0 : index
    %46 = vector.load %arg4[%c1_19, %45, %c0_20, %c0_21] : memref<2x8x8x128xf32, #tpu.memory_space<vmem>>, vector<1x1x8x128xf32>
    %47 = vector.shape_cast %46 : vector<1x1x8x128xf32> to vector<8x128xf32>
    %48 = vector.shape_cast %47 : vector<8x128xf32> to vector<1x8x128xf32>
    %49 = vector.broadcast %36 : vector<2x1x128xf32> to vector<2x8x128xf32>
    %50 = vector.broadcast %44 : vector<1x8x128xf32> to vector<2x8x128xf32>
    %51 = arith.mulf %49, %50 : vector<2x8x128xf32>
    %52 = arith.addf %24, %51 : vector<2x8x128xf32>
    %53 = vector.broadcast %40 : vector<2x1x128xf32> to vector<2x8x128xf32>
    %54 = vector.broadcast %48 : vector<1x8x128xf32> to vector<2x8x128xf32>
    %55 = arith.mulf %53, %54 : vector<2x8x128xf32>
    %56 = arith.subf %52, %55 : vector<2x8x128xf32>
    %57 = vector.broadcast %36 : vector<2x1x128xf32> to vector<2x8x128xf32>
    %58 = vector.broadcast %48 : vector<1x8x128xf32> to vector<2x8x128xf32>
    %59 = arith.mulf %57, %58 : vector<2x8x128xf32>
    %60 = arith.addf %32, %59 : vector<2x8x128xf32>
    %61 = vector.broadcast %40 : vector<2x1x128xf32> to vector<2x8x128xf32>
    %62 = vector.broadcast %44 : vector<1x8x128xf32> to vector<2x8x128xf32>
    %63 = arith.mulf %61, %62 : vector<2x8x128xf32>
    %64 = arith.addf %60, %63 : vector<2x8x128xf32>
    %c2_i32 = arith.constant 2 : i32
    %c0_22 = arith.constant 0 : index
    %65 = arith.index_cast %c2_i32 : i32 to index
    %c0_23 = arith.constant 0 : index
    %c0_24 = arith.constant 0 : index
    %66 = vector.load %arg3[%c0_22, %65, %c0_23, %c0_24] : memref<2x8x2x128xf32, #tpu.memory_space<vmem>>, vector<1x1x2x128xf32>
    %67 = vector.shape_cast %66 : vector<1x1x2x128xf32> to vector<2x128xf32>
    %68 = vector.shape_cast %67 : vector<2x128xf32> to vector<2x1x128xf32>
    %c1_25 = arith.constant 1 : index
    %69 = arith.index_cast %c2_i32 : i32 to index
    %c0_26 = arith.constant 0 : index
    %c0_27 = arith.constant 0 : index
    %70 = vector.load %arg3[%c1_25, %69, %c0_26, %c0_27] : memref<2x8x2x128xf32, #tpu.memory_space<vmem>>, vector<1x1x2x128xf32>
    %71 = vector.shape_cast %70 : vector<1x1x2x128xf32> to vector<2x128xf32>
    %72 = vector.shape_cast %71 : vector<2x128xf32> to vector<2x1x128xf32>
    %c0_28 = arith.constant 0 : index
    %73 = arith.index_cast %c2_i32 : i32 to index
    %c0_29 = arith.constant 0 : index
    %c0_30 = arith.constant 0 : index
    %74 = vector.load %arg4[%c0_28, %73, %c0_29, %c0_30] : memref<2x8x8x128xf32, #tpu.memory_space<vmem>>, vector<1x1x8x128xf32>
    %75 = vector.shape_cast %74 : vector<1x1x8x128xf32> to vector<8x128xf32>
    %76 = vector.shape_cast %75 : vector<8x128xf32> to vector<1x8x128xf32>
    %c1_31 = arith.constant 1 : index
    %77 = arith.index_cast %c2_i32 : i32 to index
    %c0_32 = arith.constant 0 : index
    %c0_33 = arith.constant 0 : index
    %78 = vector.load %arg4[%c1_31, %77, %c0_32, %c0_33] : memref<2x8x8x128xf32, #tpu.memory_space<vmem>>, vector<1x1x8x128xf32>
    %79 = vector.shape_cast %78 : vector<1x1x8x128xf32> to vector<8x128xf32>
    %80 = vector.shape_cast %79 : vector<8x128xf32> to vector<1x8x128xf32>
    %81 = vector.broadcast %68 : vector<2x1x128xf32> to vector<2x8x128xf32>
    %82 = vector.broadcast %76 : vector<1x8x128xf32> to vector<2x8x128xf32>
    %83 = arith.mulf %81, %82 : vector<2x8x128xf32>
    %84 = arith.addf %56, %83 : vector<2x8x128xf32>
    %85 = vector.broadcast %72 : vector<2x1x128xf32> to vector<2x8x128xf32>
    %86 = vector.broadcast %80 : vector<1x8x128xf32> to vector<2x8x128xf32>
    %87 = arith.mulf %85, %86 : vector<2x8x128xf32>
    %88 = arith.subf %84, %87 : vector<2x8x128xf32>
    %89 = vector.broadcast %68 : vector<2x1x128xf32> to vector<2x8x128xf32>
    %90 = vector.broadcast %80 : vector<1x8x128xf32> to vector<2x8x128xf32>
    %91 = arith.mulf %89, %90 : vector<2x8x128xf32>
    %92 = arith.addf %64, %91 : vector<2x8x128xf32>
    %93 = vector.broadcast %72 : vector<2x1x128xf32> to vector<2x8x128xf32>
    %94 = vector.broadcast %76 : vector<1x8x128xf32> to vector<2x8x128xf32>
    %95 = arith.mulf %93, %94 : vector<2x8x128xf32>
    %96 = arith.addf %92, %95 : vector<2x8x128xf32>
    %c3_i32 = arith.constant 3 : i32
    %c0_34 = arith.constant 0 : index
    %97 = arith.index_cast %c3_i32 : i32 to index
    %c0_35 = arith.constant 0 : index
    %c0_36 = arith.constant 0 : index
    %98 = vector.load %arg3[%c0_34, %97, %c0_35, %c0_36] : memref<2x8x2x128xf32, #tpu.memory_space<vmem>>, vector<1x1x2x128xf32>
    %99 = vector.shape_cast %98 : vector<1x1x2x128xf32> to vector<2x128xf32>
    %100 = vector.shape_cast %99 : vector<2x128xf32> to vector<2x1x128xf32>
    %c1_37 = arith.constant 1 : index
    %101 = arith.index_cast %c3_i32 : i32 to index
    %c0_38 = arith.constant 0 : index
    %c0_39 = arith.constant 0 : index
    %102 = vector.load %arg3[%c1_37, %101, %c0_38, %c0_39] : memref<2x8x2x128xf32, #tpu.memory_space<vmem>>, vector<1x1x2x128xf32>
    %103 = vector.shape_cast %102 : vector<1x1x2x128xf32> to vector<2x128xf32>
    %104 = vector.shape_cast %103 : vector<2x128xf32> to vector<2x1x128xf32>
    %c0_40 = arith.constant 0 : index
    %105 = arith.index_cast %c3_i32 : i32 to index
    %c0_41 = arith.constant 0 : index
    %c0_42 = arith.constant 0 : index
    %106 = vector.load %arg4[%c0_40, %105, %c0_41, %c0_42] : memref<2x8x8x128xf32, #tpu.memory_space<vmem>>, vector<1x1x8x128xf32>
    %107 = vector.shape_cast %106 : vector<1x1x8x128xf32> to vector<8x128xf32>
    %108 = vector.shape_cast %107 : vector<8x128xf32> to vector<1x8x128xf32>
    %c1_43 = arith.constant 1 : index
    %109 = arith.index_cast %c3_i32 : i32 to index
    %c0_44 = arith.constant 0 : index
    %c0_45 = arith.constant 0 : index
    %110 = vector.load %arg4[%c1_43, %109, %c0_44, %c0_45] : memref<2x8x8x128xf32, #tpu.memory_space<vmem>>, vector<1x1x8x128xf32>
    %111 = vector.shape_cast %110 : vector<1x1x8x128xf32> to vector<8x128xf32>
    %112 = vector.shape_cast %111 : vector<8x128xf32> to vector<1x8x128xf32>
    %113 = vector.broadcast %100 : vector<2x1x128xf32> to vector<2x8x128xf32>
    %114 = vector.broadcast %108 : vector<1x8x128xf32> to vector<2x8x128xf32>
    %115 = arith.mulf %113, %114 : vector<2x8x128xf32>
    %116 = arith.addf %88, %115 : vector<2x8x128xf32>
    %117 = vector.broadcast %104 : vector<2x1x128xf32> to vector<2x8x128xf32>
    %118 = vector.broadcast %112 : vector<1x8x128xf32> to vector<2x8x128xf32>
    %119 = arith.mulf %117, %118 : vector<2x8x128xf32>
    %120 = arith.subf %116, %119 : vector<2x8x128xf32>
    %121 = vector.broadcast %100 : vector<2x1x128xf32> to vector<2x8x128xf32>
    %122 = vector.broadcast %112 : vector<1x8x128xf32> to vector<2x8x128xf32>
    %123 = arith.mulf %121, %122 : vector<2x8x128xf32>
    %124 = arith.addf %96, %123 : vector<2x8x128xf32>
    %125 = vector.broadcast %104 : vector<2x1x128xf32> to vector<2x8x128xf32>
    %126 = vector.broadcast %108 : vector<1x8x128xf32> to vector<2x8x128xf32>
    %127 = arith.mulf %125, %126 : vector<2x8x128xf32>
    %128 = arith.addf %124, %127 : vector<2x8x128xf32>
    %c4_i32 = arith.constant 4 : i32
    %c0_46 = arith.constant 0 : index
    %129 = arith.index_cast %c4_i32 : i32 to index
    %c0_47 = arith.constant 0 : index
    %c0_48 = arith.constant 0 : index
    %130 = vector.load %arg3[%c0_46, %129, %c0_47, %c0_48] : memref<2x8x2x128xf32, #tpu.memory_space<vmem>>, vector<1x1x2x128xf32>
    %131 = vector.shape_cast %130 : vector<1x1x2x128xf32> to vector<2x128xf32>
    %132 = vector.shape_cast %131 : vector<2x128xf32> to vector<2x1x128xf32>
    %c1_49 = arith.constant 1 : index
    %133 = arith.index_cast %c4_i32 : i32 to index
    %c0_50 = arith.constant 0 : index
    %c0_51 = arith.constant 0 : index
    %134 = vector.load %arg3[%c1_49, %133, %c0_50, %c0_51] : memref<2x8x2x128xf32, #tpu.memory_space<vmem>>, vector<1x1x2x128xf32>
    %135 = vector.shape_cast %134 : vector<1x1x2x128xf32> to vector<2x128xf32>
    %136 = vector.shape_cast %135 : vector<2x128xf32> to vector<2x1x128xf32>
    %c0_52 = arith.constant 0 : index
    %137 = arith.index_cast %c4_i32 : i32 to index
    %c0_53 = arith.constant 0 : index
    %c0_54 = arith.constant 0 : index
    %138 = vector.load %arg4[%c0_52, %137, %c0_53, %c0_54] : memref<2x8x8x128xf32, #tpu.memory_space<vmem>>, vector<1x1x8x128xf32>
    %139 = vector.shape_cast %138 : vector<1x1x8x128xf32> to vector<8x128xf32>
    %140 = vector.shape_cast %139 : vector<8x128xf32> to vector<1x8x128xf32>
    %c1_55 = arith.constant 1 : index
    %141 = arith.index_cast %c4_i32 : i32 to index
    %c0_56 = arith.constant 0 : index
    %c0_57 = arith.constant 0 : index
    %142 = vector.load %arg4[%c1_55, %141, %c0_56, %c0_57] : memref<2x8x8x128xf32, #tpu.memory_space<vmem>>, vector<1x1x8x128xf32>
    %143 = vector.shape_cast %142 : vector<1x1x8x128xf32> to vector<8x128xf32>
    %144 = vector.shape_cast %143 : vector<8x128xf32> to vector<1x8x128xf32>
    %145 = vector.broadcast %132 : vector<2x1x128xf32> to vector<2x8x128xf32>
    %146 = vector.broadcast %140 : vector<1x8x128xf32> to vector<2x8x128xf32>
    %147 = arith.mulf %145, %146 : vector<2x8x128xf32>
    %148 = arith.addf %120, %147 : vector<2x8x128xf32>
    %149 = vector.broadcast %136 : vector<2x1x128xf32> to vector<2x8x128xf32>
    %150 = vector.broadcast %144 : vector<1x8x128xf32> to vector<2x8x128xf32>
    %151 = arith.mulf %149, %150 : vector<2x8x128xf32>
    %152 = arith.subf %148, %151 : vector<2x8x128xf32>
    %153 = vector.broadcast %132 : vector<2x1x128xf32> to vector<2x8x128xf32>
    %154 = vector.broadcast %144 : vector<1x8x128xf32> to vector<2x8x128xf32>
    %155 = arith.mulf %153, %154 : vector<2x8x128xf32>
    %156 = arith.addf %128, %155 : vector<2x8x128xf32>
    %157 = vector.broadcast %136 : vector<2x1x128xf32> to vector<2x8x128xf32>
    %158 = vector.broadcast %140 : vector<1x8x128xf32> to vector<2x8x128xf32>
    %159 = arith.mulf %157, %158 : vector<2x8x128xf32>
    %160 = arith.addf %156, %159 : vector<2x8x128xf32>
    %c5_i32 = arith.constant 5 : i32
    %c0_58 = arith.constant 0 : index
    %161 = arith.index_cast %c5_i32 : i32 to index
    %c0_59 = arith.constant 0 : index
    %c0_60 = arith.constant 0 : index
    %162 = vector.load %arg3[%c0_58, %161, %c0_59, %c0_60] : memref<2x8x2x128xf32, #tpu.memory_space<vmem>>, vector<1x1x2x128xf32>
    %163 = vector.shape_cast %162 : vector<1x1x2x128xf32> to vector<2x128xf32>
    %164 = vector.shape_cast %163 : vector<2x128xf32> to vector<2x1x128xf32>
    %c1_61 = arith.constant 1 : index
    %165 = arith.index_cast %c5_i32 : i32 to index
    %c0_62 = arith.constant 0 : index
    %c0_63 = arith.constant 0 : index
    %166 = vector.load %arg3[%c1_61, %165, %c0_62, %c0_63] : memref<2x8x2x128xf32, #tpu.memory_space<vmem>>, vector<1x1x2x128xf32>
    %167 = vector.shape_cast %166 : vector<1x1x2x128xf32> to vector<2x128xf32>
    %168 = vector.shape_cast %167 : vector<2x128xf32> to vector<2x1x128xf32>
    %c0_64 = arith.constant 0 : index
    %169 = arith.index_cast %c5_i32 : i32 to index
    %c0_65 = arith.constant 0 : index
    %c0_66 = arith.constant 0 : index
    %170 = vector.load %arg4[%c0_64, %169, %c0_65, %c0_66] : memref<2x8x8x128xf32, #tpu.memory_space<vmem>>, vector<1x1x8x128xf32>
    %171 = vector.shape_cast %170 : vector<1x1x8x128xf32> to vector<8x128xf32>
    %172 = vector.shape_cast %171 : vector<8x128xf32> to vector<1x8x128xf32>
    %c1_67 = arith.constant 1 : index
    %173 = arith.index_cast %c5_i32 : i32 to index
    %c0_68 = arith.constant 0 : index
    %c0_69 = arith.constant 0 : index
    %174 = vector.load %arg4[%c1_67, %173, %c0_68, %c0_69] : memref<2x8x8x128xf32, #tpu.memory_space<vmem>>, vector<1x1x8x128xf32>
    %175 = vector.shape_cast %174 : vector<1x1x8x128xf32> to vector<8x128xf32>
    %176 = vector.shape_cast %175 : vector<8x128xf32> to vector<1x8x128xf32>
    %177 = vector.broadcast %164 : vector<2x1x128xf32> to vector<2x8x128xf32>
    %178 = vector.broadcast %172 : vector<1x8x128xf32> to vector<2x8x128xf32>
    %179 = arith.mulf %177, %178 : vector<2x8x128xf32>
    %180 = arith.addf %152, %179 : vector<2x8x128xf32>
    %181 = vector.broadcast %168 : vector<2x1x128xf32> to vector<2x8x128xf32>
    %182 = vector.broadcast %176 : vector<1x8x128xf32> to vector<2x8x128xf32>
    %183 = arith.mulf %181, %182 : vector<2x8x128xf32>
    %184 = arith.subf %180, %183 : vector<2x8x128xf32>
    %185 = vector.broadcast %164 : vector<2x1x128xf32> to vector<2x8x128xf32>
    %186 = vector.broadcast %176 : vector<1x8x128xf32> to vector<2x8x128xf32>
    %187 = arith.mulf %185, %186 : vector<2x8x128xf32>
    %188 = arith.addf %160, %187 : vector<2x8x128xf32>
    %189 = vector.broadcast %168 : vector<2x1x128xf32> to vector<2x8x128xf32>
    %190 = vector.broadcast %172 : vector<1x8x128xf32> to vector<2x8x128xf32>
    %191 = arith.mulf %189, %190 : vector<2x8x128xf32>
    %192 = arith.addf %188, %191 : vector<2x8x128xf32>
    %c6_i32 = arith.constant 6 : i32
    %c0_70 = arith.constant 0 : index
    %193 = arith.index_cast %c6_i32 : i32 to index
    %c0_71 = arith.constant 0 : index
    %c0_72 = arith.constant 0 : index
    %194 = vector.load %arg3[%c0_70, %193, %c0_71, %c0_72] : memref<2x8x2x128xf32, #tpu.memory_space<vmem>>, vector<1x1x2x128xf32>
    %195 = vector.shape_cast %194 : vector<1x1x2x128xf32> to vector<2x128xf32>
    %196 = vector.shape_cast %195 : vector<2x128xf32> to vector<2x1x128xf32>
    %c1_73 = arith.constant 1 : index
    %197 = arith.index_cast %c6_i32 : i32 to index
    %c0_74 = arith.constant 0 : index
    %c0_75 = arith.constant 0 : index
    %198 = vector.load %arg3[%c1_73, %197, %c0_74, %c0_75] : memref<2x8x2x128xf32, #tpu.memory_space<vmem>>, vector<1x1x2x128xf32>
    %199 = vector.shape_cast %198 : vector<1x1x2x128xf32> to vector<2x128xf32>
    %200 = vector.shape_cast %199 : vector<2x128xf32> to vector<2x1x128xf32>
    %c0_76 = arith.constant 0 : index
    %201 = arith.index_cast %c6_i32 : i32 to index
    %c0_77 = arith.constant 0 : index
    %c0_78 = arith.constant 0 : index
    %202 = vector.load %arg4[%c0_76, %201, %c0_77, %c0_78] : memref<2x8x8x128xf32, #tpu.memory_space<vmem>>, vector<1x1x8x128xf32>
    %203 = vector.shape_cast %202 : vector<1x1x8x128xf32> to vector<8x128xf32>
    %204 = vector.shape_cast %203 : vector<8x128xf32> to vector<1x8x128xf32>
    %c1_79 = arith.constant 1 : index
    %205 = arith.index_cast %c6_i32 : i32 to index
    %c0_80 = arith.constant 0 : index
    %c0_81 = arith.constant 0 : index
    %206 = vector.load %arg4[%c1_79, %205, %c0_80, %c0_81] : memref<2x8x8x128xf32, #tpu.memory_space<vmem>>, vector<1x1x8x128xf32>
    %207 = vector.shape_cast %206 : vector<1x1x8x128xf32> to vector<8x128xf32>
    %208 = vector.shape_cast %207 : vector<8x128xf32> to vector<1x8x128xf32>
    %209 = vector.broadcast %196 : vector<2x1x128xf32> to vector<2x8x128xf32>
    %210 = vector.broadcast %204 : vector<1x8x128xf32> to vector<2x8x128xf32>
    %211 = arith.mulf %209, %210 : vector<2x8x128xf32>
    %212 = arith.addf %184, %211 : vector<2x8x128xf32>
    %213 = vector.broadcast %200 : vector<2x1x128xf32> to vector<2x8x128xf32>
    %214 = vector.broadcast %208 : vector<1x8x128xf32> to vector<2x8x128xf32>
    %215 = arith.mulf %213, %214 : vector<2x8x128xf32>
    %216 = arith.subf %212, %215 : vector<2x8x128xf32>
    %217 = vector.broadcast %196 : vector<2x1x128xf32> to vector<2x8x128xf32>
    %218 = vector.broadcast %208 : vector<1x8x128xf32> to vector<2x8x128xf32>
    %219 = arith.mulf %217, %218 : vector<2x8x128xf32>
    %220 = arith.addf %192, %219 : vector<2x8x128xf32>
    %221 = vector.broadcast %200 : vector<2x1x128xf32> to vector<2x8x128xf32>
    %222 = vector.broadcast %204 : vector<1x8x128xf32> to vector<2x8x128xf32>
    %223 = arith.mulf %221, %222 : vector<2x8x128xf32>
    %224 = arith.addf %220, %223 : vector<2x8x128xf32>
    %c7_i32 = arith.constant 7 : i32
    %c0_82 = arith.constant 0 : index
    %225 = arith.index_cast %c7_i32 : i32 to index
    %c0_83 = arith.constant 0 : index
    %c0_84 = arith.constant 0 : index
    %226 = vector.load %arg3[%c0_82, %225, %c0_83, %c0_84] : memref<2x8x2x128xf32, #tpu.memory_space<vmem>>, vector<1x1x2x128xf32>
    %227 = vector.shape_cast %226 : vector<1x1x2x128xf32> to vector<2x128xf32>
    %228 = vector.shape_cast %227 : vector<2x128xf32> to vector<2x1x128xf32>
    %c1_85 = arith.constant 1 : index
    %229 = arith.index_cast %c7_i32 : i32 to index
    %c0_86 = arith.constant 0 : index
    %c0_87 = arith.constant 0 : index
    %230 = vector.load %arg3[%c1_85, %229, %c0_86, %c0_87] : memref<2x8x2x128xf32, #tpu.memory_space<vmem>>, vector<1x1x2x128xf32>
    %231 = vector.shape_cast %230 : vector<1x1x2x128xf32> to vector<2x128xf32>
    %232 = vector.shape_cast %231 : vector<2x128xf32> to vector<2x1x128xf32>
    %c0_88 = arith.constant 0 : index
    %233 = arith.index_cast %c7_i32 : i32 to index
    %c0_89 = arith.constant 0 : index
    %c0_90 = arith.constant 0 : index
    %234 = vector.load %arg4[%c0_88, %233, %c0_89, %c0_90] : memref<2x8x8x128xf32, #tpu.memory_space<vmem>>, vector<1x1x8x128xf32>
    %235 = vector.shape_cast %234 : vector<1x1x8x128xf32> to vector<8x128xf32>
    %236 = vector.shape_cast %235 : vector<8x128xf32> to vector<1x8x128xf32>
    %c1_91 = arith.constant 1 : index
    %237 = arith.index_cast %c7_i32 : i32 to index
    %c0_92 = arith.constant 0 : index
    %c0_93 = arith.constant 0 : index
    %238 = vector.load %arg4[%c1_91, %237, %c0_92, %c0_93] : memref<2x8x8x128xf32, #tpu.memory_space<vmem>>, vector<1x1x8x128xf32>
    %239 = vector.shape_cast %238 : vector<1x1x8x128xf32> to vector<8x128xf32>
    %240 = vector.shape_cast %239 : vector<8x128xf32> to vector<1x8x128xf32>
    %241 = vector.broadcast %228 : vector<2x1x128xf32> to vector<2x8x128xf32>
    %242 = vector.broadcast %236 : vector<1x8x128xf32> to vector<2x8x128xf32>
    %243 = arith.mulf %241, %242 : vector<2x8x128xf32>
    %244 = arith.addf %216, %243 : vector<2x8x128xf32>
    %245 = vector.broadcast %232 : vector<2x1x128xf32> to vector<2x8x128xf32>
    %246 = vector.broadcast %240 : vector<1x8x128xf32> to vector<2x8x128xf32>
    %247 = arith.mulf %245, %246 : vector<2x8x128xf32>
    %248 = arith.subf %244, %247 : vector<2x8x128xf32>
    %249 = vector.broadcast %228 : vector<2x1x128xf32> to vector<2x8x128xf32>
    %250 = vector.broadcast %240 : vector<1x8x128xf32> to vector<2x8x128xf32>
    %251 = arith.mulf %249, %250 : vector<2x8x128xf32>
    %252 = arith.addf %224, %251 : vector<2x8x128xf32>
    %253 = vector.broadcast %232 : vector<2x1x128xf32> to vector<2x8x128xf32>
    %254 = vector.broadcast %236 : vector<1x8x128xf32> to vector<2x8x128xf32>
    %255 = arith.mulf %253, %254 : vector<2x8x128xf32>
    %256 = arith.addf %252, %255 : vector<2x8x128xf32>
    %c8_i32 = arith.constant 8 : i32
    %c0_94 = arith.constant 0 : index
    %c0_95 = arith.constant 0 : index
    %c0_96 = arith.constant 0 : index
    %c0_97 = arith.constant 0 : index
    %257 = vector.load %arg5[%c0_94, %c0_95, %c0_96, %c0_97] : memref<2x2x8x128xf32, #tpu.memory_space<vmem>>, vector<1x2x8x128xf32>
    %258 = vector.shape_cast %257 : vector<1x2x8x128xf32> to vector<2x8x128xf32>
    %259 = vector.shape_cast %248 : vector<2x8x128xf32> to vector<1x2x8x128xf32>
    tpu.vector_store %arg5[%c0_94, %c0_95, %c0_96, %c0_97], %259 {strides = array<i32>} : memref<2x2x8x128xf32, #tpu.memory_space<vmem>>, vector<1x2x8x128xf32>,
    %c1_98 = arith.constant 1 : index
    %c0_99 = arith.constant 0 : index
    %c0_100 = arith.constant 0 : index
    %c0_101 = arith.constant 0 : index
    %260 = vector.load %arg5[%c1_98, %c0_99, %c0_100, %c0_101] : memref<2x2x8x128xf32, #tpu.memory_space<vmem>>, vector<1x2x8x128xf32>
    %261 = vector.shape_cast %260 : vector<1x2x8x128xf32> to vector<2x8x128xf32>
    %262 = vector.shape_cast %256 : vector<2x8x128xf32> to vector<1x2x8x128xf32>
    tpu.vector_store %arg5[%c1_98, %c0_99, %c0_100, %c0_101], %262 {strides = array<i32>} : memref<2x2x8x128xf32, #tpu.memory_space<vmem>>, vector<1x2x8x128xf32>,
    return
  }
  func.func @transform_0(%arg0: i32, %arg1: i32, %arg2: i32) -> (i32, i32, i32, i32) {
    %c0_i32 = arith.constant 0 : i32
    %c0_i32_0 = arith.constant 0 : i32
    %c0_i32_1 = arith.constant 0 : i32
    return %c0_i32, %c0_i32_0, %arg2, %arg1 : i32, i32, i32, i32
  }
  func.func @transform_1(%arg0: i32, %arg1: i32, %arg2: i32) -> (i32, i32, i32, i32) {
    %c0_i32 = arith.constant 0 : i32
    %c0_i32_0 = arith.constant 0 : i32
    %c0_i32_1 = arith.constant 0 : i32
    return %c0_i32, %c0_i32_0, %arg0, %arg1 : i32, i32, i32, i32
  }
  func.func @transform_2(%arg0: i32, %arg1: i32, %arg2: i32) -> (i32, i32, i32, i32) {
    %c0_i32 = arith.constant 0 : i32
    %c0_i32_0 = arith.constant 0 : i32
    return %c0_i32, %arg2, %arg0, %arg1 : i32, i32, i32, i32
  }
}

</mosaic_0001>

<llo_original>
// kernel: fno2d_forward.4
$region0: #{fno2d_forward.4}
  #allocation0 [shape = 'u32[]', space=smem, size = 0x4, offset = 0x4, fixed_abs, tag = 'smem constant byte address 0x4 - core index']
  #allocation1 [shape = 'u32[144,128]{1,0:T(1,128)}', space=vmem, size = 0x12000, scoped, tag = 'internal scratch']
  %s0 = inlined_call_operand.vmem [shape: f32[2,8,2,128], index: 0, kind: input, shape index: {}]
  %s1 = inlined_call_operand.vmem [shape: f32[2,8,8,128], index: 1, kind: input, shape index: {}]
  %s2 = inlined_call_operand.vmem [shape: f32[2,2,8,128], index: 2, kind: output, shape index: {}]
  %s3 = sld [smem:[#allocation0]]
  $region18: #{fno2d_forward.4} parent=0
    _
  %s5 = ssub.s32 1, %s3
  %s6 = scalar_select 0, %s5, %s3
  // Predicated region
  $region2: #{fno2d_forward.4} parent=0 // pred_check
    _
  $region3: #{fno2d_forward.4} parent=0 // pred_check_branch
    %8 = sbr.rel (0) target = $region5
  $region4: #{fno2d_forward.4} parent=0 // pred_region
    _
  $region5: #{fno2d_forward.4} parent=0 // pred_fallthru
    _
  // Predicated region
  $region6: #{fno2d_forward.4} parent=0 // pred_check
    _
  $region7: #{fno2d_forward.4} parent=0 // pred_check_branch
    %10 = sbr.rel (0) target = $region9
  $region8: #{fno2d_forward.4} parent=0 // pred_region
    _
  $region9: #{fno2d_forward.4} parent=0 // pred_fallthru
    _
  %v11 = vld [vmem:[%s0] sm:$0x3]
  %v14 = vunpack.c.l.s4 1966171168
  %v15 = vunpack.c.0.s8 %v14
  %v16 = vlaneseq
  %v17 = vshrl.u32 %v16, 7
  %v18 = vsub.s32 %v15, %v17
  %v19 = vrot.slane %v11, %v18
  %v20 = vcombine.high %v19, %v19
  %v22 = vunpack.c.l.s4 1966171168
  %v23 = vunpack.c.0.s8 %v22
  %v24 = vlaneseq
  %v25 = vshrl.u32 %v24, 7
  %v26 = vsub.s32 %v23, %v25
  %v27 = vrot.slane %v19, %v26
  %v29 = vunpack.c.l.s4 1966171168
  %v30 = vunpack.c.0.s8 %v29
  %v31 = vlaneseq
  %v32 = vshrl.u32 %v31, 7
  %v33 = vsub.s32 %v30, %v32
  %v34 = vrot.slane %v20, %v33
  %s35 = scalar_lea.vmem %s0, 16
  %v36 = vld [vmem:[%s35] sm:$0x3]
  %v39 = vunpack.c.l.s4 1966171168
  %v40 = vunpack.c.0.s8 %v39
  %v41 = vlaneseq
  %v42 = vshrl.u32 %v41, 7
  %v43 = vsub.s32 %v40, %v42
  %v44 = vrot.slane %v36, %v43
  %v45 = vcombine.high %v44, %v44
  %v47 = vunpack.c.l.s4 1966171168
  %v48 = vunpack.c.0.s8 %v47
  %v49 = vlaneseq
  %v50 = vshrl.u32 %v49, 7
  %v51 = vsub.s32 %v48, %v50
  %v52 = vrot.slane %v44, %v51
  %v54 = vunpack.c.l.s4 1966171168
  %v55 = vunpack.c.0.s8 %v54
  %v56 = vlaneseq
  %v57 = vshrl.u32 %v56, 7
  %v58 = vsub.s32 %v55, %v57
  %v59 = vrot.slane %v45, %v58
  %v60 = vld [vmem:[%s1] sm:$0xff]
  %s61 = scalar_lea.vmem %s1, 64
  %v62 = vld [vmem:[%s61] sm:$0xff]
  %v63 = vlaneseq
  %v64 = vshrl.u32 %v63, 7
  %v65 = vsub.s32 0, %v64
  %v66 = vrot.slane %v27, %v65
  %v67 = vlaneseq
  %v68 = vshrl.u32 %v67, 7
  %v69 = vsub.s32 0, %v68
  %v70 = vrot.slane %v34, %v69
  %v73 = vmul.f32 %v66, %v60
  %v74 = vmul.f32 %v70, %v60
  %v75 = vadd.f32 %v73, 0.0
  %v76 = vadd.f32 %v74, 0.0
  %v77 = vlaneseq
  %v78 = vshrl.u32 %v77, 7
  %v79 = vsub.s32 0, %v78
  %v80 = vrot.slane %v52, %v79
  %v81 = vlaneseq
  %v82 = vshrl.u32 %v81, 7
  %v83 = vsub.s32 0, %v82
  %v84 = vrot.slane %v59, %v83
  %v87 = vmul.f32 %v80, %v62
  %v88 = vmul.f32 %v84, %v62
  %v89 = vsub.f32 %v75, %v87
  %v90 = vsub.f32 %v76, %v88
  %v91 = vmul.f32 %v66, %v62
  %v92 = vmul.f32 %v70, %v62
  %v93 = vadd.f32 %v91, 0.0
  %v94 = vadd.f32 %v92, 0.0
  %v95 = vmul.f32 %v80, %v60
  %v96 = vmul.f32 %v84, %v60
  %v97 = vadd.f32 %v93, %v95
  %v98 = vadd.f32 %v94, %v96
  %s99 = scalar_lea.vmem %s0, 2
  %v100 = vld [vmem:[%s99] sm:$0x3]
  %v103 = vunpack.c.l.s4 1966171168
  %v104 = vunpack.c.0.s8 %v103
  %v105 = vlaneseq
  %v106 = vshrl.u32 %v105, 7
  %v107 = vsub.s32 %v104, %v106
  %v108 = vrot.slane %v100, %v107
  %v109 = vcombine.high %v108, %v108
  %v111 = vunpack.c.l.s4 1966171168
  %v112 = vunpack.c.0.s8 %v111
  %v113 = vlaneseq
  %v114 = vshrl.u32 %v113, 7
  %v115 = vsub.s32 %v112, %v114
  %v116 = vrot.slane %v108, %v115
  %v118 = vunpack.c.l.s4 1966171168
  %v119 = vunpack.c.0.s8 %v118
  %v120 = vlaneseq
  %v121 = vshrl.u32 %v120, 7
  %v122 = vsub.s32 %v119, %v121
  %v123 = vrot.slane %v109, %v122
  %s124 = scalar_lea.vmem %s0, 18
  %v125 = vld [vmem:[%s124] sm:$0x3]
  %v128 = vunpack.c.l.s4 1966171168
  %v129 = vunpack.c.0.s8 %v128
  %v130 = vlaneseq
  %v131 = vshrl.u32 %v130, 7
  %v132 = vsub.s32 %v129, %v131
  %v133 = vrot.slane %v125, %v132
  %v134 = vcombine.high %v133, %v133
  %v136 = vunpack.c.l.s4 1966171168
  %v137 = vunpack.c.0.s8 %v136
  %v138 = vlaneseq
  %v139 = vshrl.u32 %v138, 7
  %v140 = vsub.s32 %v137, %v139
  %v141 = vrot.slane %v133, %v140
  %v143 = vunpack.c.l.s4 1966171168
  %v144 = vunpack.c.0.s8 %v143
  %v145 = vlaneseq
  %v146 = vshrl.u32 %v145, 7
  %v147 = vsub.s32 %v144, %v146
  %v148 = vrot.slane %v134, %v147
  %s149 = scalar_lea.vmem %s1, 8
  %v150 = vld [vmem:[%s149] sm:$0xff]
  %s151 = scalar_lea.vmem %s1, 72
  %v152 = vld [vmem:[%s151] sm:$0xff]
  %v153 = vlaneseq
  %v154 = vshrl.u32 %v153, 7
  %v155 = vsub.s32 0, %v154
  %v156 = vrot.slane %v116, %v155
  %v157 = vlaneseq
  %v158 = vshrl.u32 %v157, 7
  %v159 = vsub.s32 0, %v158
  %v160 = vrot.slane %v123, %v159
  %v163 = vmul.f32 %v156, %v150
  %v164 = vmul.f32 %v160, %v150
  %v165 = vadd.f32 %v89, %v163
  %v166 = vadd.f32 %v90, %v164
  %v167 = vlaneseq
  %v168 = vshrl.u32 %v167, 7
  %v169 = vsub.s32 0, %v168
  %v170 = vrot.slane %v141, %v169
  %v171 = vlaneseq
  %v172 = vshrl.u32 %v171, 7
  %v173 = vsub.s32 0, %v172
  %v174 = vrot.slane %v148, %v173
  %v177 = vmul.f32 %v170, %v152
  %v178 = vmul.f32 %v174, %v152
  %v179 = vsub.f32 %v165, %v177
  %v180 = vsub.f32 %v166, %v178
  %v181 = vmul.f32 %v156, %v152
  %v182 = vmul.f32 %v160, %v152
  %v183 = vadd.f32 %v97, %v181
  %v184 = vadd.f32 %v98, %v182
  %v185 = vmul.f32 %v170, %v150
  %v186 = vmul.f32 %v174, %v150
  %v187 = vadd.f32 %v183, %v185
  %v188 = vadd.f32 %v184, %v186
  %s189 = scalar_lea.vmem %s0, 4
  %v190 = vld [vmem:[%s189] sm:$0x3]
  %v193 = vunpack.c.l.s4 1966171168
  %v194 = vunpack.c.0.s8 %v193
  %v195 = vlaneseq
  %v196 = vshrl.u32 %v195, 7
  %v197 = vsub.s32 %v194, %v196
  %v198 = vrot.slane %v190, %v197
  %v199 = vcombine.high %v198, %v198
  %v201 = vunpack.c.l.s4 1966171168
  %v202 = vunpack.c.0.s8 %v201
  %v203 = vlaneseq
  %v204 = vshrl.u32 %v203, 7
  %v205 = vsub.s32 %v202, %v204
  %v206 = vrot.slane %v198, %v205
  %v208 = vunpack.c.l.s4 1966171168
  %v209 = vunpack.c.0.s8 %v208
  %v210 = vlaneseq
  %v211 = vshrl.u32 %v210, 7
  %v212 = vsub.s32 %v209, %v211
  %v213 = vrot.slane %v199, %v212
  %s214 = scalar_lea.vmem %s0, 20
  %v215 = vld [vmem:[%s214] sm:$0x3]
  %v218 = vunpack.c.l.s4 1966171168
  %v219 = vunpack.c.0.s8 %v218
  %v220 = vlaneseq
  %v221 = vshrl.u32 %v220, 7
  %v222 = vsub.s32 %v219, %v221
  %v223 = vrot.slane %v215, %v222
  %v224 = vcombine.high %v223, %v223
  %v226 = vunpack.c.l.s4 1966171168
  %v227 = vunpack.c.0.s8 %v226
  %v228 = vlaneseq
  %v229 = vshrl.u32 %v228, 7
  %v230 = vsub.s32 %v227, %v229
  %v231 = vrot.slane %v223, %v230
  %v233 = vunpack.c.l.s4 1966171168
  %v234 = vunpack.c.0.s8 %v233
  %v235 = vlaneseq
  %v236 = vshrl.u32 %v235, 7
  %v237 = vsub.s32 %v234, %v236
  %v238 = vrot.slane %v224, %v237
  %s239 = scalar_lea.vmem %s1, 16
  %v240 = vld [vmem:[%s239] sm:$0xff]
  %s241 = scalar_lea.vmem %s1, 80
  %v242 = vld [vmem:[%s241] sm:$0xff]
  %v243 = vlaneseq
  %v244 = vshrl.u32 %v243, 7
  %v245 = vsub.s32 0, %v244
  %v246 = vrot.slane %v206, %v245
  %v247 = vlaneseq
  %v248 = vshrl.u32 %v247, 7
  %v249 = vsub.s32 0, %v248
  %v250 = vrot.slane %v213, %v249
  %v253 = vmul.f32 %v246, %v240
  %v254 = vmul.f32 %v250, %v240
  %v255 = vadd.f32 %v179, %v253
  %v256 = vadd.f32 %v180, %v254
  %v257 = vlaneseq
  %v258 = vshrl.u32 %v257, 7
  %v259 = vsub.s32 0, %v258
  %v260 = vrot.slane %v231, %v259
  %v261 = vlaneseq
  %v262 = vshrl.u32 %v261, 7
  %v263 = vsub.s32 0, %v262
  %v264 = vrot.slane %v238, %v263
  %v267 = vmul.f32 %v260, %v242
  %v268 = vmul.f32 %v264, %v242
  %v269 = vsub.f32 %v255, %v267
  %v270 = vsub.f32 %v256, %v268
  %v271 = vmul.f32 %v246, %v242
  %v272 = vmul.f32 %v250, %v242
  %v273 = vadd.f32 %v187, %v271
  %v274 = vadd.f32 %v188, %v272
  %v275 = vmul.f32 %v260, %v240
  %v276 = vmul.f32 %v264, %v240
  %v277 = vadd.f32 %v273, %v275
  %v278 = vadd.f32 %v274, %v276
  %s279 = scalar_lea.vmem %s0, 6
  %v280 = vld [vmem:[%s279] sm:$0x3]
  %v283 = vunpack.c.l.s4 1966171168
  %v284 = vunpack.c.0.s8 %v283
  %v285 = vlaneseq
  %v286 = vshrl.u32 %v285, 7
  %v287 = vsub.s32 %v284, %v286
  %v288 = vrot.slane %v280, %v287
  %v289 = vcombine.high %v288, %v288
  %v291 = vunpack.c.l.s4 1966171168
  %v292 = vunpack.c.0.s8 %v291
  %v293 = vlaneseq
  %v294 = vshrl.u32 %v293, 7
  %v295 = vsub.s32 %v292, %v294
  %v296 = vrot.slane %v288, %v295
  %v298 = vunpack.c.l.s4 1966171168
  %v299 = vunpack.c.0.s8 %v298
  %v300 = vlaneseq
  %v301 = vshrl.u32 %v300, 7
  %v302 = vsub.s32 %v299, %v301
  %v303 = vrot.slane %v289, %v302
  %s304 = scalar_lea.vmem %s0, 22
  %v305 = vld [vmem:[%s304] sm:$0x3]
  %v308 = vunpack.c.l.s4 1966171168
  %v309 = vunpack.c.0.s8 %v308
  %v310 = vlaneseq
  %v311 = vshrl.u32 %v310, 7
  %v312 = vsub.s32 %v309, %v311
  %v313 = vrot.slane %v305, %v312
  %v314 = vcombine.high %v313, %v313
  %v316 = vunpack.c.l.s4 1966171168
  %v317 = vunpack.c.0.s8 %v316
  %v318 = vlaneseq
  %v319 = vshrl.u32 %v318, 7
  %v320 = vsub.s32 %v317, %v319
  %v321 = vrot.slane %v313, %v320
  %v323 = vunpack.c.l.s4 1966171168
  %v324 = vunpack.c.0.s8 %v323
  %v325 = vlaneseq
  %v326 = vshrl.u32 %v325, 7
  %v327 = vsub.s32 %v324, %v326
  %v328 = vrot.slane %v314, %v327
  %s329 = scalar_lea.vmem %s1, 24
  %v330 = vld [vmem:[%s329] sm:$0xff]
  %s331 = scalar_lea.vmem %s1, 88
  %v332 = vld [vmem:[%s331] sm:$0xff]
  %v333 = vlaneseq
  %v334 = vshrl.u32 %v333, 7
  %v335 = vsub.s32 0, %v334
  %v336 = vrot.slane %v296, %v335
  %v337 = vlaneseq
  %v338 = vshrl.u32 %v337, 7
  %v339 = vsub.s32 0, %v338
  %v340 = vrot.slane %v303, %v339
  %v343 = vmul.f32 %v336, %v330
  %v344 = vmul.f32 %v340, %v330
  %v345 = vadd.f32 %v269, %v343
  %v346 = vadd.f32 %v270, %v344
  %v347 = vlaneseq
  %v348 = vshrl.u32 %v347, 7
  %v349 = vsub.s32 0, %v348
  %v350 = vrot.slane %v321, %v349
  %v351 = vlaneseq
  %v352 = vshrl.u32 %v351, 7
  %v353 = vsub.s32 0, %v352
  %v354 = vrot.slane %v328, %v353
  %v357 = vmul.f32 %v350, %v332
  %v358 = vmul.f32 %v354, %v332
  %v359 = vsub.f32 %v345, %v357
  %v360 = vsub.f32 %v346, %v358
  %v361 = vmul.f32 %v336, %v332
  %v362 = vmul.f32 %v340, %v332
  %v363 = vadd.f32 %v277, %v361
  %v364 = vadd.f32 %v278, %v362
  %v365 = vmul.f32 %v350, %v330
  %v366 = vmul.f32 %v354, %v330
  %v367 = vadd.f32 %v363, %v365
  %v368 = vadd.f32 %v364, %v366
  %s369 = scalar_lea.vmem %s0, 8
  %v370 = vld [vmem:[%s369] sm:$0x3]
  %v373 = vunpack.c.l.s4 1966171168
  %v374 = vunpack.c.0.s8 %v373
  %v375 = vlaneseq
  %v376 = vshrl.u32 %v375, 7
  %v377 = vsub.s32 %v374, %v376
  %v378 = vrot.slane %v370, %v377
  %v379 = vcombine.high %v378, %v378
  %v381 = vunpack.c.l.s4 1966171168
  %v382 = vunpack.c.0.s8 %v381
  %v383 = vlaneseq
  %v384 = vshrl.u32 %v383, 7
  %v385 = vsub.s32 %v382, %v384
  %v386 = vrot.slane %v378, %v385
  %v388 = vunpack.c.l.s4 1966171168
  %v389 = vunpack.c.0.s8 %v388
  %v390 = vlaneseq
  %v391 = vshrl.u32 %v390, 7
  %v392 = vsub.s32 %v389, %v391
  %v393 = vrot.slane %v379, %v392
  %s394 = scalar_lea.vmem %s0, 24
  %v395 = vld [vmem:[%s394] sm:$0x3]
  %v398 = vunpack.c.l.s4 1966171168
  %v399 = vunpack.c.0.s8 %v398
  %v400 = vlaneseq
  %v401 = vshrl.u32 %v400, 7
  %v402 = vsub.s32 %v399, %v401
  %v403 = vrot.slane %v395, %v402
  %v404 = vcombine.high %v403, %v403
  %v406 = vunpack.c.l.s4 1966171168
  %v407 = vunpack.c.0.s8 %v406
  %v408 = vlaneseq
  %v409 = vshrl.u32 %v408, 7
  %v410 = vsub.s32 %v407, %v409
  %v411 = vrot.slane %v403, %v410
  %v413 = vunpack.c.l.s4 1966171168
  %v414 = vunpack.c.0.s8 %v413
  %v415 = vlaneseq
  %v416 = vshrl.u32 %v415, 7
  %v417 = vsub.s32 %v414, %v416
  %v418 = vrot.slane %v404, %v417
  %s419 = scalar_lea.vmem %s1, 32
  %v420 = vld [vmem:[%s419] sm:$0xff]
  %s421 = scalar_lea.vmem %s1, 96
  %v422 = vld [vmem:[%s421] sm:$0xff]
  %v423 = vlaneseq
  %v424 = vshrl.u32 %v423, 7
  %v425 = vsub.s32 0, %v424
  %v426 = vrot.slane %v386, %v425
  %v427 = vlaneseq
  %v428 = vshrl.u32 %v427, 7
  %v429 = vsub.s32 0, %v428
  %v430 = vrot.slane %v393, %v429
  %v433 = vmul.f32 %v426, %v420
  %v434 = vmul.f32 %v430, %v420
  %v435 = vadd.f32 %v359, %v433
  %v436 = vadd.f32 %v360, %v434
  %v437 = vlaneseq
  %v438 = vshrl.u32 %v437, 7
  %v439 = vsub.s32 0, %v438
  %v440 = vrot.slane %v411, %v439
  %v441 = vlaneseq
  %v442 = vshrl.u32 %v441, 7
  %v443 = vsub.s32 0, %v442
  %v444 = vrot.slane %v418, %v443
  %v447 = vmul.f32 %v440, %v422
  %v448 = vmul.f32 %v444, %v422
  %v449 = vsub.f32 %v435, %v447
  %v450 = vsub.f32 %v436, %v448
  %v451 = vmul.f32 %v426, %v422
  %v452 = vmul.f32 %v430, %v422
  %v453 = vadd.f32 %v367, %v451
  %v454 = vadd.f32 %v368, %v452
  %v455 = vmul.f32 %v440, %v420
  %v456 = vmul.f32 %v444, %v420
  %v457 = vadd.f32 %v453, %v455
  %v458 = vadd.f32 %v454, %v456
  %s459 = scalar_lea.vmem %s0, 10
  %v460 = vld [vmem:[%s459] sm:$0x3]
  %v463 = vunpack.c.l.s4 1966171168
  %v464 = vunpack.c.0.s8 %v463
  %v465 = vlaneseq
  %v466 = vshrl.u32 %v465, 7
  %v467 = vsub.s32 %v464, %v466
  %v468 = vrot.slane %v460, %v467
  %v469 = vcombine.high %v468, %v468
  %v471 = vunpack.c.l.s4 1966171168
  %v472 = vunpack.c.0.s8 %v471
  %v473 = vlaneseq
  %v474 = vshrl.u32 %v473, 7
  %v475 = vsub.s32 %v472, %v474
  %v476 = vrot.slane %v468, %v475
  %v478 = vunpack.c.l.s4 1966171168
  %v479 = vunpack.c.0.s8 %v478
  %v480 = vlaneseq
  %v481 = vshrl.u32 %v480, 7
  %v482 = vsub.s32 %v479, %v481
  %v483 = vrot.slane %v469, %v482
  %s484 = scalar_lea.vmem %s0, 26
  %v485 = vld [vmem:[%s484] sm:$0x3]
  %v488 = vunpack.c.l.s4 1966171168
  %v489 = vunpack.c.0.s8 %v488
  %v490 = vlaneseq
  %v491 = vshrl.u32 %v490, 7
  %v492 = vsub.s32 %v489, %v491
  %v493 = vrot.slane %v485, %v492
  %v494 = vcombine.high %v493, %v493
  %v496 = vunpack.c.l.s4 1966171168
  %v497 = vunpack.c.0.s8 %v496
  %v498 = vlaneseq
  %v499 = vshrl.u32 %v498, 7
  %v500 = vsub.s32 %v497, %v499
  %v501 = vrot.slane %v493, %v500
  %v503 = vunpack.c.l.s4 1966171168
  %v504 = vunpack.c.0.s8 %v503
  %v505 = vlaneseq
  %v506 = vshrl.u32 %v505, 7
  %v507 = vsub.s32 %v504, %v506
  %v508 = vrot.slane %v494, %v507
  %s509 = scalar_lea.vmem %s1, 40
  %v510 = vld [vmem:[%s509] sm:$0xff]
  %s511 = scalar_lea.vmem %s1, 104
  %v512 = vld [vmem:[%s511] sm:$0xff]
  %v513 = vlaneseq
  %v514 = vshrl.u32 %v513, 7
  %v515 = vsub.s32 0, %v514
  %v516 = vrot.slane %v476, %v515
  %v517 = vlaneseq
  %v518 = vshrl.u32 %v517, 7
  %v519 = vsub.s32 0, %v518
  %v520 = vrot.slane %v483, %v519
  %v523 = vmul.f32 %v516, %v510
  %v524 = vmul.f32 %v520, %v510
  %v525 = vadd.f32 %v449, %v523
  %v526 = vadd.f32 %v450, %v524
  %v527 = vlaneseq
  %v528 = vshrl.u32 %v527, 7
  %v529 = vsub.s32 0, %v528
  %v530 = vrot.slane %v501, %v529
  %v531 = vlaneseq
  %v532 = vshrl.u32 %v531, 7
  %v533 = vsub.s32 0, %v532
  %v534 = vrot.slane %v508, %v533
  %v537 = vmul.f32 %v530, %v512
  %v538 = vmul.f32 %v534, %v512
  %v539 = vsub.f32 %v525, %v537
  %v540 = vsub.f32 %v526, %v538
  %v541 = vmul.f32 %v516, %v512
  %v542 = vmul.f32 %v520, %v512
  %v543 = vadd.f32 %v457, %v541
  %v544 = vadd.f32 %v458, %v542
  %v545 = vmul.f32 %v530, %v510
  %v546 = vmul.f32 %v534, %v510
  %v547 = vadd.f32 %v543, %v545
  %v548 = vadd.f32 %v544, %v546
  %s549 = scalar_lea.vmem %s0, 12
  %v550 = vld [vmem:[%s549] sm:$0x3]
  %v553 = vunpack.c.l.s4 1966171168
  %v554 = vunpack.c.0.s8 %v553
  %v555 = vlaneseq
  %v556 = vshrl.u32 %v555, 7
  %v557 = vsub.s32 %v554, %v556
  %v558 = vrot.slane %v550, %v557
  %v559 = vcombine.high %v558, %v558
  %v561 = vunpack.c.l.s4 1966171168
  %v562 = vunpack.c.0.s8 %v561
  %v563 = vlaneseq
  %v564 = vshrl.u32 %v563, 7
  %v565 = vsub.s32 %v562, %v564
  %v566 = vrot.slane %v558, %v565
  %v568 = vunpack.c.l.s4 1966171168
  %v569 = vunpack.c.0.s8 %v568
  %v570 = vlaneseq
  %v571 = vshrl.u32 %v570, 7
  %v572 = vsub.s32 %v569, %v571
  %v573 = vrot.slane %v559, %v572
  %s574 = scalar_lea.vmem %s0, 28
  %v575 = vld [vmem:[%s574] sm:$0x3]
  %v578 = vunpack.c.l.s4 1966171168
  %v579 = vunpack.c.0.s8 %v578
  %v580 = vlaneseq
  %v581 = vshrl.u32 %v580, 7
  %v582 = vsub.s32 %v579, %v581
  %v583 = vrot.slane %v575, %v582
  %v584 = vcombine.high %v583, %v583
  %v586 = vunpack.c.l.s4 1966171168
  %v587 = vunpack.c.0.s8 %v586
  %v588 = vlaneseq
  %v589 = vshrl.u32 %v588, 7
  %v590 = vsub.s32 %v587, %v589
  %v591 = vrot.slane %v583, %v590
  %v593 = vunpack.c.l.s4 1966171168
  %v594 = vunpack.c.0.s8 %v593
  %v595 = vlaneseq
  %v596 = vshrl.u32 %v595, 7
  %v597 = vsub.s32 %v594, %v596
  %v598 = vrot.slane %v584, %v597
  %s599 = scalar_lea.vmem %s1, 48
  %v600 = vld [vmem:[%s599] sm:$0xff]
  %s601 = scalar_lea.vmem %s1, 112
  %v602 = vld [vmem:[%s601] sm:$0xff]
  %v603 = vlaneseq
  %v604 = vshrl.u32 %v603, 7
  %v605 = vsub.s32 0, %v604
  %v606 = vrot.slane %v566, %v605
  %v607 = vlaneseq
  %v608 = vshrl.u32 %v607, 7
  %v609 = vsub.s32 0, %v608
  %v610 = vrot.slane %v573, %v609
  %v613 = vmul.f32 %v606, %v600
  %v614 = vmul.f32 %v610, %v600
  %v615 = vadd.f32 %v539, %v613
  %v616 = vadd.f32 %v540, %v614
  %v617 = vlaneseq
  %v618 = vshrl.u32 %v617, 7
  %v619 = vsub.s32 0, %v618
  %v620 = vrot.slane %v591, %v619
  %v621 = vlaneseq
  %v622 = vshrl.u32 %v621, 7
  %v623 = vsub.s32 0, %v622
  %v624 = vrot.slane %v598, %v623
  %v627 = vmul.f32 %v620, %v602
  %v628 = vmul.f32 %v624, %v602
  %v629 = vsub.f32 %v615, %v627
  %v630 = vsub.f32 %v616, %v628
  %v631 = vmul.f32 %v606, %v602
  %v632 = vmul.f32 %v610, %v602
  %v633 = vadd.f32 %v547, %v631
  %v634 = vadd.f32 %v548, %v632
  %v635 = vmul.f32 %v620, %v600
  %v636 = vmul.f32 %v624, %v600
  %v637 = vadd.f32 %v633, %v635
  %v638 = vadd.f32 %v634, %v636
  %s639 = scalar_lea.vmem %s0, 14
  %v640 = vld [vmem:[%s639] sm:$0x3]
  %v643 = vunpack.c.l.s4 1966171168
  %v644 = vunpack.c.0.s8 %v643
  %v645 = vlaneseq
  %v646 = vshrl.u32 %v645, 7
  %v647 = vsub.s32 %v644, %v646
  %v648 = vrot.slane %v640, %v647
  %v649 = vcombine.high %v648, %v648
  %v651 = vunpack.c.l.s4 1966171168
  %v652 = vunpack.c.0.s8 %v651
  %v653 = vlaneseq
  %v654 = vshrl.u32 %v653, 7
  %v655 = vsub.s32 %v652, %v654
  %v656 = vrot.slane %v648, %v655
  %v658 = vunpack.c.l.s4 1966171168
  %v659 = vunpack.c.0.s8 %v658
  %v660 = vlaneseq
  %v661 = vshrl.u32 %v660, 7
  %v662 = vsub.s32 %v659, %v661
  %v663 = vrot.slane %v649, %v662
  %s664 = scalar_lea.vmem %s0, 30
  %v665 = vld [vmem:[%s664] sm:$0x3]
  %v668 = vunpack.c.l.s4 1966171168
  %v669 = vunpack.c.0.s8 %v668
  %v670 = vlaneseq
  %v671 = vshrl.u32 %v670, 7
  %v672 = vsub.s32 %v669, %v671
  %v673 = vrot.slane %v665, %v672
  %v674 = vcombine.high %v673, %v673
  %v676 = vunpack.c.l.s4 1966171168
  %v677 = vunpack.c.0.s8 %v676
  %v678 = vlaneseq
  %v679 = vshrl.u32 %v678, 7
  %v680 = vsub.s32 %v677, %v679
  %v681 = vrot.slane %v673, %v680
  %v683 = vunpack.c.l.s4 1966171168
  %v684 = vunpack.c.0.s8 %v683
  %v685 = vlaneseq
  %v686 = vshrl.u32 %v685, 7
  %v687 = vsub.s32 %v684, %v686
  %v688 = vrot.slane %v674, %v687
  %s689 = scalar_lea.vmem %s1, 56
  %v690 = vld [vmem:[%s689] sm:$0xff]
  %s691 = scalar_lea.vmem %s1, 120
  %v692 = vld [vmem:[%s691] sm:$0xff]
  %v693 = vlaneseq
  %v694 = vshrl.u32 %v693, 7
  %v695 = vsub.s32 0, %v694
  %v696 = vrot.slane %v656, %v695
  %v697 = vlaneseq
  %v698 = vshrl.u32 %v697, 7
  %v699 = vsub.s32 0, %v698
  %v700 = vrot.slane %v663, %v699
  %v703 = vmul.f32 %v696, %v690
  %v704 = vmul.f32 %v700, %v690
  %v705 = vadd.f32 %v629, %v703
  %v706 = vadd.f32 %v630, %v704
  %v707 = vlaneseq
  %v708 = vshrl.u32 %v707, 7
  %v709 = vsub.s32 0, %v708
  %v710 = vrot.slane %v681, %v709
  %v711 = vlaneseq
  %v712 = vshrl.u32 %v711, 7
  %v713 = vsub.s32 0, %v712
  %v714 = vrot.slane %v688, %v713
  %v717 = vmul.f32 %v710, %v692
  %v718 = vmul.f32 %v714, %v692
  %v719 = vsub.f32 %v705, %v717
  %v720 = vsub.f32 %v706, %v718
  %v721 = vmul.f32 %v696, %v692
  %v722 = vmul.f32 %v700, %v692
  %v723 = vadd.f32 %v637, %v721
  %v724 = vadd.f32 %v638, %v722
  %v725 = vmul.f32 %v710, %v690
  %v726 = vmul.f32 %v714, %v690
  %v727 = vadd.f32 %v723, %v725
  %v728 = vadd.f32 %v724, %v726
  %729 = vst [vmem:[%s2] sm:$0xff] %v719
  %730 = vst [vmem:[%s2 + $0x8] sm:$0xff] %v720
  %s731 = scalar_lea.vmem %s2, 16
  %732 = vst [vmem:[%s731] sm:$0xff] %v727
  %733 = vst [vmem:[%s731 + $0x8] sm:$0xff] %v728
  // Predicated region
  $region10: #{fno2d_forward.4} parent=0 // pred_check
    _
  $region11: #{fno2d_forward.4} parent=0 // pred_check_branch
    %735 = sbr.rel (0) target = $region13
  $region12: #{fno2d_forward.4} parent=0 // pred_region
    _
  $region13: #{fno2d_forward.4} parent=0 // pred_fallthru
    _
  // Predicated region
  $region14: #{fno2d_forward.4} parent=0 // pred_check
    _
  $region15: #{fno2d_forward.4} parent=0 // pred_check_branch
    %737 = sbr.rel (0) target = $region17
  $region16: #{fno2d_forward.4} parent=0 // pred_region
    _
  $region17: #{fno2d_forward.4} parent=0 // pred_fallthru
    _

// kernel: reverse.9
$region0: #{reverse.9}
  %s0 = inlined_call_operand.vmem [shape: f32[2,8,16,7], index: 0, kind: input, shape index: {}]
  %s1 = inlined_call_operand.vmem [shape: f32[2,8,16,7], index: 1, kind: output, shape index: {}]
  $region1: #{reverse.9} parent=0
    #allocation0 [shape = 'u8[131072]{0}', space=vmem, size = 0x20000, scoped, tag = 'operand span for operand 0']
    #allocation1 [shape = 'u8[65536]{0}', space=vmem, size = 0x10000, scoped, tag = 'operand span for operand 1']
    %s2 = scalar_lea.vmem [#allocation0], 8
    // Predicated region
    $region2: #{reverse.9} parent=1 // pred_check
      _
    $region3: #{reverse.9} parent=1 // pred_check_branch
      %4 = sbr.rel (0) target = $region5
    $region4: #{reverse.9} parent=1 // pred_region
      // Predicated region
      $region6: #{reverse.9} parent=4 // pred_check
        _
      $region7: #{reverse.9} parent=4 // pred_check_branch
        %6 = sbr.rel (0) target = $region9
      $region8: #{reverse.9} parent=4 // pred_region
        // Predicated region
        $region21: #{reverse.9} parent=8 // pred_check
          _
        $region22: #{reverse.9} parent=8 // pred_check_branch
          %51 = sbr.rel (0) target = $region24
        $region23: #{reverse.9} parent=8 // pred_region
          loop: start=0, step=1, limit=1
          $region25: #{reverse.9} parent=23 // loop_pre_header
            _
          $region26: #{reverse.9} parent=23 // loop_header
            %s53 = sphi 0, %s57
            %p54 = scmp.ge.s32.totalorder %s53, 1
            %s58 = sphi %s0, %s0
            %s59 = sphi %s2, %s2
          $region27: #{reverse.9} parent=23 // loop_header_branch
            %56 = sbr.rel (%p54) target = $region31
          $region28: #{reverse.9} parent=23 // loop_body
            %v60 = vld [vmem:[%s58] sm:$0xff]
            %61 = vst [vmem:[%s59] sm:$0xff] %v60
            %v62 = vld [vmem:[%s58 + $0x8] sm:$0xff]
            %63 = vst [vmem:[%s59 + $0x10] sm:$0xff] %v62
            %v64 = vld [vmem:[%s58 + $0x10] sm:$0xff]
            %65 = vst [vmem:[%s59 + $0x20] sm:$0xff] %v64
            %v66 = vld [vmem:[%s58 + $0x18] sm:$0xff]
            %67 = vst [vmem:[%s59 + $0x30] sm:$0xff] %v66
            %v68 = vld [vmem:[%s58 + $0x20] sm:$0xff]
            %69 = vst [vmem:[%s59 + $0x40] sm:$0xff] %v68
            %v70 = vld [vmem:[%s58 + $0x28] sm:$0xff]
            %71 = vst [vmem:[%s59 + $0x50] sm:$0xff] %v70
            %v72 = vld [vmem:[%s58 + $0x30] sm:$0xff]
            %73 = vst [vmem:[%s59 + $0x60] sm:$0xff] %v72
            %v74 = vld [vmem:[%s58 + $0x38] sm:$0xff]
            %75 = vst [vmem:[%s59 + $0x70] sm:$0xff] %v74
            %v76 = vld [vmem:[%s58 + $0x40] sm:$0xff]
            %77 = vst [vmem:[%s59 + $0x80] sm:$0xff] %v76
            %v78 = vld [vmem:[%s58 + $0x48] sm:$0xff]
            %79 = vst [vmem:[%s59 + $0x90] sm:$0xff] %v78
            %v80 = vld [vmem:[%s58 + $0x50] sm:$0xff]
            %81 = vst [vmem:[%s59 + $0xa0] sm:$0xff] %v80
            %v82 = vld [vmem:[%s58 + $0x58] sm:$0xff]
            %83 = vst [vmem:[%s59 + $0xb0] sm:$0xff] %v82
            %v84 = vld [vmem:[%s58 + $0x60] sm:$0xff]
            %85 = vst [vmem:[%s59 + $0xc0] sm:$0xff] %v84
            %v86 = vld [vmem:[%s58 + $0x68] sm:$0xff]
            %87 = vst [vmem:[%s59 + $0xd0] sm:$0xff] %v86
            %v88 = vld [vmem:[%s58 + $0x70] sm:$0xff]
            %89 = vst [vmem:[%s59 + $0xe0] sm:$0xff] %v88
            %v90 = vld [vmem:[%s58 + $0x78] sm:$0xff]
            %91 = vst [vmem:[%s59 + $0xf0] sm:$0xff] %v90
          $region29: #{reverse.9} parent=23 // loop_footer
            %s57 = sadd.s32 1, %s53
          $region30: #{reverse.9} parent=23 // loop_footer_branch
            %52 = sbr.rel target = $region26
          $region31: #{reverse.9} parent=23 // loop_exit
            _
        $region24: #{reverse.9} parent=8 // pred_fallthru
          _
        // Predicated region
        $region32: #{reverse.9} parent=8 // pred_check
          _
        $region33: #{reverse.9} parent=8 // pred_check_branch
          %93 = sbr.rel target = $region35
        $region34: #{reverse.9} parent=8 // pred_region
          _
        $region35: #{reverse.9} parent=8 // pred_fallthru
          _
      $region9: #{reverse.9} parent=4 // pred_fallthru
        _
      // Predicated region
      $region10: #{reverse.9} parent=4 // pred_check
        _
      $region11: #{reverse.9} parent=4 // pred_check_branch
        %8 = sbr.rel target = $region13
      $region12: #{reverse.9} parent=4 // pred_region
        loop: start=0, step=1, limit=1
        $region14: #{reverse.9} parent=12 // loop_pre_header
          _
        $region15: #{reverse.9} parent=12 // loop_header
          %s11 = sphi 0, %s15
          %p12 = scmp.ge.s32.totalorder %s11, 1
          %s16 = sphi %s0, %s0
          %s17 = sphi %s2, %s2
        $region16: #{reverse.9} parent=12 // loop_header_branch
          %14 = sbr.rel (%p12) target = $region20
        $region17: #{reverse.9} parent=12 // loop_body
          %v18 = vld [vmem:[%s16] sm:$0xff]
          %19 = vst [vmem:[%s17] sm:$0xff] %v18
          %v20 = vld [vmem:[%s16 + $0x8] sm:$0xff]
          %21 = vst [vmem:[%s17 + $0x10] sm:$0xff] %v20
          %v22 = vld [vmem:[%s16 + $0x10] sm:$0xff]
          %23 = vst [vmem:[%s17 + $0x20] sm:$0xff] %v22
          %v24 = vld [vmem:[%s16 + $0x18] sm:$0xff]
          %25 = vst [vmem:[%s17 + $0x30] sm:$0xff] %v24
          %v26 = vld [vmem:[%s16 + $0x20] sm:$0xff]
          %27 = vst [vmem:[%s17 + $0x40] sm:$0xff] %v26
          %v28 = vld [vmem:[%s16 + $0x28] sm:$0xff]
          %29 = vst [vmem:[%s17 + $0x50] sm:$0xff] %v28
          %v30 = vld [vmem:[%s16 + $0x30] sm:$0xff]
          %31 = vst [vmem:[%s17 + $0x60] sm:$0xff] %v30
          %v32 = vld [vmem:[%s16 + $0x38] sm:$0xff]
          %33 = vst [vmem:[%s17 + $0x70] sm:$0xff] %v32
          %v34 = vld [vmem:[%s16 + $0x40] sm:$0xff]
          %35 = vst [vmem:[%s17 + $0x80] sm:$0xff] %v34
          %v36 = vld [vmem:[%s16 + $0x48] sm:$0xff]
          %37 = vst [vmem:[%s17 + $0x90] sm:$0xff] %v36
          %v38 = vld [vmem:[%s16 + $0x50] sm:$0xff]
          %39 = vst [vmem:[%s17 + $0xa0] sm:$0xff] %v38
          %v40 = vld [vmem:[%s16 + $0x58] sm:$0xff]
          %41 = vst [vmem:[%s17 + $0xb0] sm:$0xff] %v40
          %v42 = vld [vmem:[%s16 + $0x60] sm:$0xff]
          %43 = vst [vmem:[%s17 + $0xc0] sm:$0xff] %v42
          %v44 = vld [vmem:[%s16 + $0x68] sm:$0xff]
          %45 = vst [vmem:[%s17 + $0xd0] sm:$0xff] %v44
          %v46 = vld [vmem:[%s16 + $0x70] sm:$0xff]
          %47 = vst [vmem:[%s17 + $0xe0] sm:$0xff] %v46
          %v48 = vld [vmem:[%s16 + $0x78] sm:$0xff]
          %49 = vst [vmem:[%s17 + $0xf0] sm:$0xff] %v48
        $region18: #{reverse.9} parent=12 // loop_footer
          %s15 = sadd.s32 1, %s11
        $region19: #{reverse.9} parent=12 // loop_footer_branch
          %10 = sbr.rel target = $region15
        $region20: #{reverse.9} parent=12 // loop_exit
          _
      $region13: #{reverse.9} parent=4 // pred_fallthru
        _
    $region5: #{reverse.9} parent=1 // pred_fallthru
      _
    %94 = vnop
    %s95 = scalar_lea.vmem [#allocation0], 7
    %v96 = vld [vmem:[%s95] ss:$-1 sm:$0xff]
    %v97 = vrot.slane %v96, 1
    %98 = vst [vmem:[#allocation1] sm:$0xff] %v97
    %s99 = scalar_lea.vmem [#allocation0], 8
    %s100 = scalar_lea.vmem %s99, 7 [#allocation0]
    %v101 = vld [vmem:[%s100] ss:$-1 sm:$0xff]
    %v102 = vrot.slane %v101, 1
    %v103 = vlaneseq
    %v104 = vshrl.u32 %v103, 7
    %vm105 = vcmp.lt.s32.totalorder %v104, 7
    %106 = vst.msk [vmem:[#allocation1] sm:$0xff] %vm105, %v102
    %s107 = scalar_lea.vmem [#allocation1], 8
    %s108 = scalar_lea.vmem [#allocation0], 16
    %s109 = scalar_lea.vmem %s108, 7 [#allocation0]
    %v110 = vld [vmem:[%s109] ss:$-1 sm:$0xff]
    %v111 = vrot.slane %v110, 1
    %112 = vst [vmem:[%s107] sm:$0xff] %v111
    %s113 = scalar_lea.vmem %s108, 8 [#allocation0]
    %s114 = scalar_lea.vmem %s113, 7 [#allocation0]
    %v115 = vld [vmem:[%s114] ss:$-1 sm:$0xff]
    %v116 = vrot.slane %v115, 1
    %v117 = vlaneseq
    %v118 = vshrl.u32 %v117, 7
    %vm119 = vcmp.lt.s32.totalorder %v118, 7
    %120 = vst.msk [vmem:[%s107] sm:$0xff] %vm119, %v116
    %s121 = scalar_lea.vmem [#allocation1], 16
    %s122 = scalar_lea.vmem [#allocation0], 32
    %s123 = scalar_lea.vmem %s122, 7 [#allocation0]
    %v124 = vld [vmem:[%s123] ss:$-1 sm:$0xff]
    %v125 = vrot.slane %v124, 1
    %126 = vst [vmem:[%s121] sm:$0xff] %v125
    %s127 = scalar_lea.vmem %s122, 8 [#allocation0]
    %s128 = scalar_lea.vmem %s127, 7 [#allocation0]
    %v129 = vld [vmem:[%s128] ss:$-1 sm:$0xff]
    %v130 = vrot.slane %v129, 1
    %v131 = vlaneseq
    %v132 = vshrl.u32 %v131, 7
    %vm133 = vcmp.lt.s32.totalorder %v132, 7
    %134 = vst.msk [vmem:[%s121] sm:$0xff] %vm133, %v130
    %s135 = scalar_lea.vmem [#allocation1], 24
    %s136 = scalar_lea.vmem [#allocation0], 48
    %s137 = scalar_lea.vmem %s136, 7 [#allocation0]
    %v138 = vld [vmem:[%s137] ss:$-1 sm:$0xff]
    %v139 = vrot.slane %v138, 1
    %140 = vst [vmem:[%s135] sm:$0xff] %v139
    %s141 = scalar_lea.vmem %s136, 8 [#allocation0]
    %s142 = scalar_lea.vmem %s141, 7 [#allocation0]
    %v143 = vld [vmem:[%s142] ss:$-1 sm:$0xff]
    %v144 = vrot.slane %v143, 1
    %v145 = vlaneseq
    %v146 = vshrl.u32 %v145, 7
    %vm147 = vcmp.lt.s32.totalorder %v146, 7
    %148 = vst.msk [vmem:[%s135] sm:$0xff] %vm147, %v144
    %s149 = scalar_lea.vmem [#allocation1], 32
    %s150 = scalar_lea.vmem [#allocation0], 64
    %s151 = scalar_lea.vmem %s150, 7 [#allocation0]
    %v152 = vld [vmem:[%s151] ss:$-1 sm:$0xff]
    %v153 = vrot.slane %v152, 1
    %154 = vst [vmem:[%s149] sm:$0xff] %v153
    %s155 = scalar_lea.vmem %s150, 8 [#allocation0]
    %s156 = scalar_lea.vmem %s155, 7 [#allocation0]
    %v157 = vld [vmem:[%s156] ss:$-1 sm:$0xff]
    %v158 = vrot.slane %v157, 1
    %v159 = vlaneseq
    %v160 = vshrl.u32 %v159, 7
    %vm161 = vcmp.lt.s32.totalorder %v160, 7
    %162 = vst.msk [vmem:[%s149] sm:$0xff] %vm161, %v158
    %s163 = scalar_lea.vmem [#allocation1], 40
    %s164 = scalar_lea.vmem [#allocation0], 80
    %s165 = scalar_lea.vmem %s164, 7 [#allocation0]
    %v166 = vld [vmem:[%s165] ss:$-1 sm:$0xff]
    %v167 = vrot.slane %v166, 1
    %168 = vst [vmem:[%s163] sm:$0xff] %v167
    %s169 = scalar_lea.vmem %s164, 8 [#allocation0]
    %s170 = scalar_lea.vmem %s169, 7 [#allocation0]
    %v171 = vld [vmem:[%s170] ss:$-1 sm:$0xff]
    %v172 = vrot.slane %v171, 1
    %v173 = vlaneseq
    %v174 = vshrl.u32 %v173, 7
    %vm175 = vcmp.lt.s32.totalorder %v174, 7
    %176 = vst.msk [vmem:[%s163] sm:$0xff] %vm175, %v172
    %s177 = scalar_lea.vmem [#allocation1], 48
    %s178 = scalar_lea.vmem [#allocation0], 96
    %s179 = scalar_lea.vmem %s178, 7 [#allocation0]
    %v180 = vld [vmem:[%s179] ss:$-1 sm:$0xff]
    %v181 = vrot.slane %v180, 1
    %182 = vst [vmem:[%s177] sm:$0xff] %v181
    %s183 = scalar_lea.vmem %s178, 8 [#allocation0]
    %s184 = scalar_lea.vmem %s183, 7 [#allocation0]
    %v185 = vld [vmem:[%s184] ss:$-1 sm:$0xff]
    %v186 = vrot.slane %v185, 1
    %v187 = vlaneseq
    %v188 = vshrl.u32 %v187, 7
    %vm189 = vcmp.lt.s32.totalorder %v188, 7
    %190 = vst.msk [vmem:[%s177] sm:$0xff] %vm189, %v186
    %s191 = scalar_lea.vmem [#allocation1], 56
    %s192 = scalar_lea.vmem [#allocation0], 112
    %s193 = scalar_lea.vmem %s192, 7 [#allocation0]
    %v194 = vld [vmem:[%s193] ss:$-1 sm:$0xff]
    %v195 = vrot.slane %v194, 1
    %196 = vst [vmem:[%s191] sm:$0xff] %v195
    %s197 = scalar_lea.vmem %s192, 8 [#allocation0]
    %s198 = scalar_lea.vmem %s197, 7 [#allocation0]
    %v199 = vld [vmem:[%s198] ss:$-1 sm:$0xff]
    %v200 = vrot.slane %v199, 1
    %v201 = vlaneseq
    %v202 = vshrl.u32 %v201, 7
    %vm203 = vcmp.lt.s32.totalorder %v202, 7
    %204 = vst.msk [vmem:[%s191] sm:$0xff] %vm203, %v200
    %s205 = scalar_lea.vmem [#allocation1], 64
    %s206 = scalar_lea.vmem [#allocation0], 128
    %s207 = scalar_lea.vmem %s206, 7 [#allocation0]
    %v208 = vld [vmem:[%s207] ss:$-1 sm:$0xff]
    %v209 = vrot.slane %v208, 1
    %210 = vst [vmem:[%s205] sm:$0xff] %v209
    %s211 = scalar_lea.vmem %s206, 8 [#allocation0]
    %s212 = scalar_lea.vmem %s211, 7 [#allocation0]
    %v213 = vld [vmem:[%s212] ss:$-1 sm:$0xff]
    %v214 = vrot.slane %v213, 1
    %v215 = vlaneseq
    %v216 = vshrl.u32 %v215, 7
    %vm217 = vcmp.lt.s32.totalorder %v216, 7
    %218 = vst.msk [vmem:[%s205] sm:$0xff] %vm217, %v214
    %s219 = scalar_lea.vmem [#allocation1], 72
    %s220 = scalar_lea.vmem [#allocation0], 144
    %s221 = scalar_lea.vmem %s220, 7 [#allocation0]
    %v222 = vld [vmem:[%s221] ss:$-1 sm:$0xff]
    %v223 = vrot.slane %v222, 1
    %224 = vst [vmem:[%s219] sm:$0xff] %v223
    %s225 = scalar_lea.vmem %s220, 8 [#allocation0]
    %s226 = scalar_lea.vmem %s225, 7 [#allocation0]
    %v227 = vld [vmem:[%s226] ss:$-1 sm:$0xff]
    %v228 = vrot.slane %v227, 1
    %v229 = vlaneseq
    %v230 = vshrl.u32 %v229, 7
    %vm231 = vcmp.lt.s32.totalorder %v230, 7
    %232 = vst.msk [vmem:[%s219] sm:$0xff] %vm231, %v228
    %s233 = scalar_lea.vmem [#allocation1], 80
    %s234 = scalar_lea.vmem [#allocation0], 160
    %s235 = scalar_lea.vmem %s234, 7 [#allocation0]
    %v236 = vld [vmem:[%s235] ss:$-1 sm:$0xff]
    %v237 = vrot.slane %v236, 1
    %238 = vst [vmem:[%s233] sm:$0xff] %v237
    %s239 = scalar_lea.vmem %s234, 8 [#allocation0]
    %s240 = scalar_lea.vmem %s239, 7 [#allocation0]
    %v241 = vld [vmem:[%s240] ss:$-1 sm:$0xff]
    %v242 = vrot.slane %v241, 1
    %v243 = vlaneseq
    %v244 = vshrl.u32 %v243, 7
    %vm245 = vcmp.lt.s32.totalorder %v244, 7
    %246 = vst.msk [vmem:[%s233] sm:$0xff] %vm245, %v242
    %s247 = scalar_lea.vmem [#allocation1], 88
    %s248 = scalar_lea.vmem [#allocation0], 176
    %s249 = scalar_lea.vmem %s248, 7 [#allocation0]
    %v250 = vld [vmem:[%s249] ss:$-1 sm:$0xff]
    %v251 = vrot.slane %v250, 1
    %252 = vst [vmem:[%s247] sm:$0xff] %v251
    %s253 = scalar_lea.vmem %s248, 8 [#allocation0]
    %s254 = scalar_lea.vmem %s253, 7 [#allocation0]
    %v255 = vld [vmem:[%s254] ss:$-1 sm:$0xff]
    %v256 = vrot.slane %v255, 1
    %v257 = vlaneseq
    %v258 = vshrl.u32 %v257, 7
    %vm259 = vcmp.lt.s32.totalorder %v258, 7
    %260 = vst.msk [vmem:[%s247] sm:$0xff] %vm259, %v256
    %s261 = scalar_lea.vmem [#allocation1], 96
    %s262 = scalar_lea.vmem [#allocation0], 192
    %s263 = scalar_lea.vmem %s262, 7 [#allocation0]
    %v264 = vld [vmem:[%s263] ss:$-1 sm:$0xff]
    %v265 = vrot.slane %v264, 1
    %266 = vst [vmem:[%s261] sm:$0xff] %v265
    %s267 = scalar_lea.vmem %s262, 8 [#allocation0]
    %s268 = scalar_lea.vmem %s267, 7 [#allocation0]
    %v269 = vld [vmem:[%s268] ss:$-1 sm:$0xff]
    %v270 = vrot.slane %v269, 1
    %v271 = vlaneseq
    %v272 = vshrl.u32 %v271, 7
    %vm273 = vcmp.lt.s32.totalorder %v272, 7
    %274 = vst.msk [vmem:[%s261] sm:$0xff] %vm273, %v270
    %s275 = scalar_lea.vmem [#allocation1], 104
    %s276 = scalar_lea.vmem [#allocation0], 208
    %s277 = scalar_lea.vmem %s276, 7 [#allocation0]
    %v278 = vld [vmem:[%s277] ss:$-1 sm:$0xff]
    %v279 = vrot.slane %v278, 1
    %280 = vst [vmem:[%s275] sm:$0xff] %v279
    %s281 = scalar_lea.vmem %s276, 8 [#allocation0]
    %s282 = scalar_lea.vmem %s281, 7 [#allocation0]
    %v283 = vld [vmem:[%s282] ss:$-1 sm:$0xff]
    %v284 = vrot.slane %v283, 1
    %v285 = vlaneseq
    %v286 = vshrl.u32 %v285, 7
    %vm287 = vcmp.lt.s32.totalorder %v286, 7
    %288 = vst.msk [vmem:[%s275] sm:$0xff] %vm287, %v284
    %s289 = scalar_lea.vmem [#allocation1], 112
    %s290 = scalar_lea.vmem [#allocation0], 224
    %s291 = scalar_lea.vmem %s290, 7 [#allocation0]
    %v292 = vld [vmem:[%s291] ss:$-1 sm:$0xff]
    %v293 = vrot.slane %v292, 1
    %294 = vst [vmem:[%s289] sm:$0xff] %v293
    %s295 = scalar_lea.vmem %s290, 8 [#allocation0]
    %s296 = scalar_lea.vmem %s295, 7 [#allocation0]
    %v297 = vld [vmem:[%s296] ss:$-1 sm:$0xff]
    %v298 = vrot.slane %v297, 1
    %v299 = vlaneseq
    %v300 = vshrl.u32 %v299, 7
    %vm301 = vcmp.lt.s32.totalorder %v300, 7
    %302 = vst.msk [vmem:[%s289] sm:$0xff] %vm301, %v298
    %s303 = scalar_lea.vmem [#allocation1], 120
    %s304 = scalar_lea.vmem [#allocation0], 240
    %s305 = scalar_lea.vmem %s304, 7 [#allocation0]
    %v306 = vld [vmem:[%s305] ss:$-1 sm:$0xff]
    %v307 = vrot.slane %v306, 1
    %308 = vst [vmem:[%s303] sm:$0xff] %v307
    %s309 = scalar_lea.vmem %s304, 8 [#allocation0]
    %s310 = scalar_lea.vmem %s309, 7 [#allocation0]
    %v311 = vld [vmem:[%s310] ss:$-1 sm:$0xff]
    %v312 = vrot.slane %v311, 1
    %v313 = vlaneseq
    %v314 = vshrl.u32 %v313, 7
    %vm315 = vcmp.lt.s32.totalorder %v314, 7
    %316 = vst.msk [vmem:[%s303] sm:$0xff] %vm315, %v312
    // Predicated region
    $region36: #{reverse.9} parent=1 // pred_check
      _
    $region37: #{reverse.9} parent=1 // pred_check_branch
      %318 = sbr.rel (0) target = $region39
    $region38: #{reverse.9} parent=1 // pred_region
      // Predicated region
      $region40: #{reverse.9} parent=38 // pred_check
        _
      $region41: #{reverse.9} parent=38 // pred_check_branch
        %320 = sbr.rel (0) target = $region43
      $region42: #{reverse.9} parent=38 // pred_region
        // Predicated region
        $region55: #{reverse.9} parent=42 // pred_check
          _
        $region56: #{reverse.9} parent=42 // pred_check_branch
          %365 = sbr.rel (0) target = $region58
        $region57: #{reverse.9} parent=42 // pred_region
          loop: start=0, step=1, limit=1
          $region59: #{reverse.9} parent=57 // loop_pre_header
            _
          $region60: #{reverse.9} parent=57 // loop_header
            %s367 = sphi 0, %s371
            %p368 = scmp.ge.s32.totalorder %s367, 1
            %s372 = sphi [#allocation1], [#allocation1]
            %s373 = sphi %s1, %s1
          $region61: #{reverse.9} parent=57 // loop_header_branch
            %370 = sbr.rel (%p368) target = $region65
          $region62: #{reverse.9} parent=57 // loop_body
            %v374 = vld [vmem:[%s372] sm:$0xff]
            %375 = vst [vmem:[%s373] sm:$0xff] %v374
            %v376 = vld [vmem:[%s372 + $0x8] sm:$0xff]
            %377 = vst [vmem:[%s373 + $0x8] sm:$0xff] %v376
            %v378 = vld [vmem:[%s372 + $0x10] sm:$0xff]
            %379 = vst [vmem:[%s373 + $0x10] sm:$0xff] %v378
            %v380 = vld [vmem:[%s372 + $0x18] sm:$0xff]
            %381 = vst [vmem:[%s373 + $0x18] sm:$0xff] %v380
            %v382 = vld [vmem:[%s372 + $0x20] sm:$0xff]
            %383 = vst [vmem:[%s373 + $0x20] sm:$0xff] %v382
            %v384 = vld [vmem:[%s372 + $0x28] sm:$0xff]
            %385 = vst [vmem:[%s373 + $0x28] sm:$0xff] %v384
            %v386 = vld [vmem:[%s372 + $0x30] sm:$0xff]
            %387 = vst [vmem:[%s373 + $0x30] sm:$0xff] %v386
            %v388 = vld [vmem:[%s372 + $0x38] sm:$0xff]
            %389 = vst [vmem:[%s373 + $0x38] sm:$0xff] %v388
            %v390 = vld [vmem:[%s372 + $0x40] sm:$0xff]
            %391 = vst [vmem:[%s373 + $0x40] sm:$0xff] %v390
            %v392 = vld [vmem:[%s372 + $0x48] sm:$0xff]
            %393 = vst [vmem:[%s373 + $0x48] sm:$0xff] %v392
            %v394 = vld [vmem:[%s372 + $0x50] sm:$0xff]
            %395 = vst [vmem:[%s373 + $0x50] sm:$0xff] %v394
            %v396 = vld [vmem:[%s372 + $0x58] sm:$0xff]
            %397 = vst [vmem:[%s373 + $0x58] sm:$0xff] %v396
            %v398 = vld [vmem:[%s372 + $0x60] sm:$0xff]
            %399 = vst [vmem:[%s373 + $0x60] sm:$0xff] %v398
            %v400 = vld [vmem:[%s372 + $0x68] sm:$0xff]
            %401 = vst [vmem:[%s373 + $0x68] sm:$0xff] %v400
            %v402 = vld [vmem:[%s372 + $0x70] sm:$0xff]
            %403 = vst [vmem:[%s373 + $0x70] sm:$0xff] %v402
            %v404 = vld [vmem:[%s372 + $0x78] sm:$0xff]
            %405 = vst [vmem:[%s373 + $0x78] sm:$0xff] %v404
          $region63: #{reverse.9} parent=57 // loop_footer
            %s371 = sadd.s32 1, %s367
          $region64: #{reverse.9} parent=57 // loop_footer_branch
            %366 = sbr.rel target = $region60
          $region65: #{reverse.9} parent=57 // loop_exit
            _
        $region58: #{reverse.9} parent=42 // pred_fallthru
          _
        // Predicated region
        $region66: #{reverse.9} parent=42 // pred_check
          _
        $region67: #{reverse.9} parent=42 // pred_check_branch
          %407 = sbr.rel target = $region69
        $region68: #{reverse.9} parent=42 // pred_region
          _
        $region69: #{reverse.9} parent=42 // pred_fallthru
          _
      $region43: #{reverse.9} parent=38 // pred_fallthru
        _
      // Predicated region
      $region44: #{reverse.9} parent=38 // pred_check
        _
      $region45: #{reverse.9} parent=38 // pred_check_branch
        %322 = sbr.rel target = $region47
      $region46: #{reverse.9} parent=38 // pred_region
        loop: start=0, step=1, limit=1
        $region48: #{reverse.9} parent=46 // loop_pre_header
          _
        $region49: #{reverse.9} parent=46 // loop_header
          %s325 = sphi 0, %s329
          %p326 = scmp.ge.s32.totalorder %s325, 1
          %s330 = sphi [#allocation1], [#allocation1]
          %s331 = sphi %s1, %s1
        $region50: #{reverse.9} parent=46 // loop_header_branch
          %328 = sbr.rel (%p326) target = $region54
        $region51: #{reverse.9} parent=46 // loop_body
          %v332 = vld [vmem:[%s330] sm:$0xff]
          %333 = vst [vmem:[%s331] sm:$0xff] %v332
          %v334 = vld [vmem:[%s330 + $0x8] sm:$0xff]
          %335 = vst [vmem:[%s331 + $0x8] sm:$0xff] %v334
          %v336 = vld [vmem:[%s330 + $0x10] sm:$0xff]
          %337 = vst [vmem:[%s331 + $0x10] sm:$0xff] %v336
          %v338 = vld [vmem:[%s330 + $0x18] sm:$0xff]
          %339 = vst [vmem:[%s331 + $0x18] sm:$0xff] %v338
          %v340 = vld [vmem:[%s330 + $0x20] sm:$0xff]
          %341 = vst [vmem:[%s331 + $0x20] sm:$0xff] %v340
          %v342 = vld [vmem:[%s330 + $0x28] sm:$0xff]
          %343 = vst [vmem:[%s331 + $0x28] sm:$0xff] %v342
          %v344 = vld [vmem:[%s330 + $0x30] sm:$0xff]
          %345 = vst [vmem:[%s331 + $0x30] sm:$0xff] %v344
          %v346 = vld [vmem:[%s330 + $0x38] sm:$0xff]
          %347 = vst [vmem:[%s331 + $0x38] sm:$0xff] %v346
          %v348 = vld [vmem:[%s330 + $0x40] sm:$0xff]
          %349 = vst [vmem:[%s331 + $0x40] sm:$0xff] %v348
          %v350 = vld [vmem:[%s330 + $0x48] sm:$0xff]
          %351 = vst [vmem:[%s331 + $0x48] sm:$0xff] %v350
          %v352 = vld [vmem:[%s330 + $0x50] sm:$0xff]
          %353 = vst [vmem:[%s331 + $0x50] sm:$0xff] %v352
          %v354 = vld [vmem:[%s330 + $0x58] sm:$0xff]
          %355 = vst [vmem:[%s331 + $0x58] sm:$0xff] %v354
          %v356 = vld [vmem:[%s330 + $0x60] sm:$0xff]
          %357 = vst [vmem:[%s331 + $0x60] sm:$0xff] %v356
          %v358 = vld [vmem:[%s330 + $0x68] sm:$0xff]
          %359 = vst [vmem:[%s331 + $0x68] sm:$0xff] %v358
          %v360 = vld [vmem:[%s330 + $0x70] sm:$0xff]
          %361 = vst [vmem:[%s331 + $0x70] sm:$0xff] %v360
          %v362 = vld [vmem:[%s330 + $0x78] sm:$0xff]
          %363 = vst [vmem:[%s331 + $0x78] sm:$0xff] %v362
        $region52: #{reverse.9} parent=46 // loop_footer
          %s329 = sadd.s32 1, %s325
        $region53: #{reverse.9} parent=46 // loop_footer_branch
          %324 = sbr.rel target = $region49
        $region54: #{reverse.9} parent=46 // loop_exit
          _
      $region47: #{reverse.9} parent=38 // pred_fallthru
        _
    $region39: #{reverse.9} parent=1 // pred_fallthru
      _
    %408 = vnop

</llo_original>
